<compile_context>
chip_gen: v5e
topology: v5e:2x2
jax: 0.10.0
libtpu: 0.0.40
codegen_flags: <defaults>
</compile_context>

<pallas_src>
import math

import jax
import jax.numpy as jnp
from jax.experimental import pallas as pl
from jax.experimental.pallas import tpu as pltpu


# ----------------------------------------------------------------------------
# Fused, batch-tiled CBAM kernel (Bt batch elements per grid step)
# ----------------------------------------------------------------------------
def _cbam_kernel(x_ref, w1_ref, w2_ref, b12_ref, sp_ref, o_ref, pooled_ref):
    """x:(Bt,C,N) f32, w1/w2:(C,C) f32, b12:(C,2) f32, sp:(3,) f32 SMEM,
    o:(Bt,C,N) f32, pooled scratch:(C,2*Bt) f32 VMEM."""
    Bt, C, N = x_ref.shape
    inv_n = 1.0 / N
    inv_c = 1.0 / C

    # ---- pack max/avg pools of all Bt batch elements into ONE (C, 2*Bt) ----
    # Columns [0, Bt) hold the max-pool branch, [Bt, 2*Bt) the avg-pool branch;
    # channels stay on the sublane axis so the result directly scales x rows.
    for b in range(Bt):
        xb = x_ref[b]                                             # (C, N)
        pooled_ref[:, b:b + 1] = jnp.max(xb, axis=-1, keepdims=True)
        pooled_ref[:, Bt + b:Bt + b + 1] = (
            jnp.sum(xb, axis=-1, keepdims=True) * inv_n)

    # ---- shared MLP1: one wide MXU matmul pair per grid step ----------------
    b1 = b12_ref[:, 0:1]        # layer-1 bias (folded BN beta; conv bias dropped under BN)
    b2 = b12_ref[:, 1:2]        # layer-2 conv bias (applied per branch, as in PyTorch)
    h = jnp.dot(w1_ref[...], pooled_ref[...],
                preferred_element_type=jnp.float32) + b1          # (C, 2*Bt)
    h = jnp.maximum(h, 0.0)                                       # ReLU
    y = jnp.dot(w2_ref[...], h, preferred_element_type=jnp.float32) + b2

    # sigmoid(MLP1(MP1) + MLP1(AP1)) for every batch element in the tile.
    w_ch = jax.nn.sigmoid(y[:, 0:Bt] + y[:, Bt:2 * Bt])           # (C, Bt)

    # ---- channel scale + spatial attention (2->1 conv, BN folded) -----------
    sp0 = sp_ref[0]
    sp1 = sp_ref[1]
    sp2 = sp_ref[2]
    for b in range(Bt):
        x_ca = x_ref[b] * w_ch[:, b:b + 1]                        # (C, N)
        mx2 = jnp.max(x_ca, axis=0, keepdims=True)                # (1, N)
        av2 = jnp.sum(x_ca, axis=0, keepdims=True) * inv_c        # (1, N)
        w_sp = jax.nn.sigmoid(sp0 * mx2 + sp1 * av2 + sp2)
        o_ref[b] = x_ca * w_sp                                    # lane-dense store


# ----------------------------------------------------------------------------
# Batch-tile picker: biggest divisor of B under the VMEM block budget,
# preferring >= 2 grid steps so v7x's two TensorCores both get work.
# ----------------------------------------------------------------------------
def _pick_batch_tile(B, C, N, itemsize=4, block_budget_bytes=16 << 20):
    per_batch = 2 * 2 * C * N * itemsize          # in + out, double-buffered
    cap = max(1, block_budget_bytes // per_batch)
    divisors = [d for d in range(1, B + 1) if B % d == 0 and d <= cap]
    bt = max(divisors) if divisors else 1
    if bt == B and B > 1:
        smaller = [d for d in divisors if d < B]
        if smaller:
            bt = max(smaller)
    return bt


def cbam_forward(x, params, *, batch_tile=None):
    """CBAM forward.  x: (B, C, N) float32 -> (B, C, N) float32."""
    B, C, N = x.shape
    itemsize = jnp.dtype(x.dtype).itemsize
    bt = batch_tile if batch_tile is not None else _pick_batch_tile(B, C, N, itemsize)
    assert B % bt == 0, f"batch {B} must be divisible by batch tile {bt}"

    block_bytes = bt * C * N * itemsize
    weight_bytes = 2 * C * C * 4 + C * 2 * 4
    scratch_bytes = C * 2 * bt * 4
    vmem_limit = int(min(max(4 * block_bytes + 2 * weight_bytes + scratch_bytes
                             + (4 << 20), 16 << 20), 48 << 20))

    return pl.pallas_call(
        _cbam_kernel,
        out_shape=jax.ShapeDtypeStruct((B, C, N), jnp.float32),
        grid=(B // bt,),
        in_specs=[
            pl.BlockSpec((bt, C, N), lambda i: (i, 0, 0)),       # input features
            pl.BlockSpec((C, C), lambda i: (0, 0)),              # MLP1 layer-1 W (f32)
            pl.BlockSpec((C, C), lambda i: (0, 0)),              # MLP1 layer-2 W (f32)
            pl.BlockSpec((C, 2), lambda i: (0, 0)),              # packed biases
            pl.BlockSpec(memory_space=pltpu.MemorySpace.SMEM),   # spatial conv scalars
        ],
        out_specs=pl.BlockSpec((bt, C, N), lambda i: (i, 0, 0)),
        scratch_shapes=[pltpu.VMEM((C, 2 * bt), jnp.float32)],   # packed pooled operand
        compiler_params=pltpu.CompilerParams(
            dimension_semantics=("parallel",),                   # shard batch tiles on v7x's 2 TCs
            vmem_limit_bytes=vmem_limit,
        ),
    )(x, params["w1"], params["w2"], params["bias12"], params["spatial"])


# ----------------------------------------------------------------------------
# Parameters (deterministic synthetic init; eval-mode BN folded into W, b)
# ----------------------------------------------------------------------------
def make_cbam_params(key, cn):
    k1, k2, kb2, kg1, kbt1, ks, kgs, kbs = jax.random.split(key, 8)

    # MLP1 layer 1: Conv1d(cn->cn, bn=True, relu)  (conv bias disabled under BN)
    w1 = jax.random.normal(k1, (cn, cn), jnp.float32) / math.sqrt(cn)
    gamma1 = 1.0 + 0.1 * jax.random.normal(kg1, (cn,), jnp.float32)
    beta1 = 0.1 * jax.random.normal(kbt1, (cn,), jnp.float32)
    scale1 = gamma1 / jnp.sqrt(1.0 + 1e-5)          # running mean=0, var=1
    w1 = w1 * scale1[:, None]
    b1 = beta1

    # MLP1 layer 2: Conv1d(cn->cn, activation=None), plain bias, no BN
    w2 = jax.random.normal(k2, (cn, cn), jnp.float32) / math.sqrt(cn)
    b2 = 0.01 * jax.random.normal(kb2, (cn,), jnp.float32)

    # conv_layer: Conv1d(2->1, bn=True, activation=None)
    ws = jax.random.normal(ks, (1, 2), jnp.float32) / math.sqrt(2.0)
    gs = 1.0 + 0.1 * jax.random.normal(kgs, (1,), jnp.float32)
    bs = 0.1 * jax.random.normal(kbs, (1,), jnp.float32)
    ws = ws * (gs / jnp.sqrt(1.0 + 1e-5))[:, None]

    return dict(
        w1=w1,                                                   # (cn, cn) f32
        w2=w2,                                                   # (cn, cn) f32
        bias12=jnp.stack([b1, b2], axis=1).astype(jnp.float32),  # (cn, 2)
        spatial=jnp.concatenate([ws.reshape(-1), bs]).astype(jnp.float32),  # (3,)
    )


# ----------------------------------------------------------------------------
# Plain-JAX full-f32 reference for verification
# ----------------------------------------------------------------------------
def cbam_reference(x, params):
    w1, w2 = params["w1"], params["w2"]
    b1 = params["bias12"][:, 0]
    b2 = params["bias12"][:, 1]
    sp = params["spatial"]

    def mlp1(v):                                  # v: (B, C)
        h = jnp.einsum("oc,bc->bo", w1, v,
                       precision=jax.lax.Precision.HIGHEST) + b1
        h = jnp.maximum(h, 0.0)
        return jnp.einsum("oc,bc->bo", w2, h,
                          precision=jax.lax.Precision.HIGHEST) + b2

    mx = jnp.max(x, axis=-1)
    av = jnp.mean(x, axis=-1)
    w_ch = jax.nn.sigmoid(mlp1(mx) + mlp1(av))    # (B, C)
    x_ca = x * w_ch[:, :, None]

    mx2 = jnp.max(x_ca, axis=1, keepdims=True)
    av2 = jnp.mean(x_ca, axis=1, keepdims=True)
    w_sp = jax.nn.sigmoid(sp[0] * mx2 + sp[1] * av2 + sp[2])
    return x_ca * w_sp


# ----------------------------------------------------------------------------
# Main
# ----------------------------------------------------------------------------
if __name__ == "__main__":
    key = jax.random.PRNGKey(0)
    kx, kp = jax.random.split(key)

    B, C, N = 8, 128, 128                         # small, lane-dense demo shapes
    x = jax.random.normal(kx, (B, C, N), jnp.float32)
    params = make_cbam_params(kp, C)

    fwd = jax.jit(cbam_forward)
    out = fwd(x, params)
    jax.block_until_ready(out)

    ref = jax.jit(cbam_reference)(x, params)
    jax.block_until_ready(ref)

    assert out.shape == (B, C, N)
    diff = jnp.abs(out - ref)
    max_err = float(jnp.max(diff))
    mean_err = float(jnp.mean(diff))
    # Tolerances cover the TPU's default f32 matmul precision inside the kernel
    # (possibly a bf16-operand pass) vs. the full-f32 XLA reference; structural
    # bugs produce errors O(0.1-1).
    assert max_err < 5e-2 and mean_err < 5e-3, (
        f"mismatch vs reference: max={max_err}, mean={mean_err}")
    print("KERNEL_OK")
</pallas_src>

<mosaic_0001>
module attributes {stable_mosaic.version = 11 : i64} {
  func.func @_cbam_kernel(%arg0: i32, %arg1: memref<4x128x128xf32, #tpu.memory_space<vmem>>, %arg2: memref<128x128xf32, #tpu.memory_space<vmem>>, %arg3: memref<128x128xf32, #tpu.memory_space<vmem>>, %arg4: memref<128x2xf32, #tpu.memory_space<vmem>>, %arg5: memref<3xf32, #tpu.memory_space<smem>>, %arg6: memref<4x128x128xf32, #tpu.memory_space<vmem>>, %arg7: memref<128x8xf32, #tpu.memory_space<vmem>>) attributes {dimension_semantics = [#tpu.dimension_semantics<parallel>], iteration_bounds = array<i64: 2>, scalar_prefetch = 0 : i64, scratch_operands = 1 : i64, tpu.core_type = #tpu.core_type<tc>, window_params = [{transform_indices = @transform_0, window_bounds = array<i64: 4, 128, 128>}, {pipeline_mode = #tpu.pipeline_mode<synchronous>, transform_indices = @transform_1, window_bounds = array<i64: 128, 128>}, {pipeline_mode = #tpu.pipeline_mode<synchronous>, transform_indices = @transform_2, window_bounds = array<i64: 128, 128>}, {pipeline_mode = #tpu.pipeline_mode<synchronous>, transform_indices = @transform_3, window_bounds = array<i64: 128, 2>}, {transform_indices = @transform_4, window_bounds = array<i64: 3>}, {transform_indices = @transform_5, window_bounds = array<i64: 4, 128, 128>}]} {
    %c0 = arith.constant 0 : index
    %c0_0 = arith.constant 0 : index
    %c0_1 = arith.constant 0 : index
    %0 = vector.load %arg1[%c0, %c0_0, %c0_1] : memref<4x128x128xf32, #tpu.memory_space<vmem>>, vector<1x128x128xf32>
    %1 = vector.shape_cast %0 : vector<1x128x128xf32> to vector<128x128xf32>
    %cst = arith.constant dense<0xFF800000> : vector<128xf32>
    %2 = vector.multi_reduction <maximumf>, %1, %cst [1] : vector<128x128xf32> to vector<128xf32>
    %3 = vector.shape_cast %2 : vector<128xf32> to vector<128x1xf32>
    %c0_2 = arith.constant 0 : index
    %c0_3 = arith.constant 0 : index
    %4 = vector.load %arg7[%c0_2, %c0_3] : memref<128x8xf32, #tpu.memory_space<vmem>>, vector<128x1xf32>
    tpu.vector_store %arg7[%c0_2, %c0_3], %3 {strides = array<i32>} : memref<128x8xf32, #tpu.memory_space<vmem>>, vector<128x1xf32>,
    %cst_4 = arith.constant dense<0.000000e+00> : vector<128xf32>
    %5 = vector.multi_reduction <add>, %1, %cst_4 [1] : vector<128x128xf32> to vector<128xf32>
    %6 = vector.shape_cast %5 : vector<128xf32> to vector<128x1xf32>
    %cst_5 = arith.constant 7.812500e-03 : f32
    %7 = vector.broadcast %cst_5 : f32 to vector<128x1xf32>
    %8 = arith.mulf %6, %7 : vector<128x1xf32>
    %c0_6 = arith.constant 0 : index
    %c4 = arith.constant 4 : index
    %9 = vector.load %arg7[%c0_6, %c4] : memref<128x8xf32, #tpu.memory_space<vmem>>, vector<128x1xf32>
    tpu.vector_store %arg7[%c0_6, %c4], %8 {strides = array<i32>} : memref<128x8xf32, #tpu.memory_space<vmem>>, vector<128x1xf32>,
    %c1 = arith.constant 1 : index
    %c0_7 = arith.constant 0 : index
    %c0_8 = arith.constant 0 : index
    %10 = vector.load %arg1[%c1, %c0_7, %c0_8] : memref<4x128x128xf32, #tpu.memory_space<vmem>>, vector<1x128x128xf32>
    %11 = vector.shape_cast %10 : vector<1x128x128xf32> to vector<128x128xf32>
    %cst_9 = arith.constant dense<0xFF800000> : vector<128xf32>
    %12 = vector.multi_reduction <maximumf>, %11, %cst_9 [1] : vector<128x128xf32> to vector<128xf32>
    %13 = vector.shape_cast %12 : vector<128xf32> to vector<128x1xf32>
    %c0_10 = arith.constant 0 : index
    %c1_11 = arith.constant 1 : index
    %14 = vector.load %arg7[%c0_10, %c1_11] : memref<128x8xf32, #tpu.memory_space<vmem>>, vector<128x1xf32>
    tpu.vector_store %arg7[%c0_10, %c1_11], %13 {strides = array<i32>} : memref<128x8xf32, #tpu.memory_space<vmem>>, vector<128x1xf32>,
    %cst_12 = arith.constant dense<0.000000e+00> : vector<128xf32>
    %15 = vector.multi_reduction <add>, %11, %cst_12 [1] : vector<128x128xf32> to vector<128xf32>
    %16 = vector.shape_cast %15 : vector<128xf32> to vector<128x1xf32>
    %cst_13 = arith.constant 7.812500e-03 : f32
    %17 = vector.broadcast %cst_13 : f32 to vector<128x1xf32>
    %18 = arith.mulf %16, %17 : vector<128x1xf32>
    %c0_14 = arith.constant 0 : index
    %c5 = arith.constant 5 : index
    %19 = vector.load %arg7[%c0_14, %c5] : memref<128x8xf32, #tpu.memory_space<vmem>>, vector<128x1xf32>
    tpu.vector_store %arg7[%c0_14, %c5], %18 {strides = array<i32>} : memref<128x8xf32, #tpu.memory_space<vmem>>, vector<128x1xf32>,
    %c2 = arith.constant 2 : index
    %c0_15 = arith.constant 0 : index
    %c0_16 = arith.constant 0 : index
    %20 = vector.load %arg1[%c2, %c0_15, %c0_16] : memref<4x128x128xf32, #tpu.memory_space<vmem>>, vector<1x128x128xf32>
    %21 = vector.shape_cast %20 : vector<1x128x128xf32> to vector<128x128xf32>
    %cst_17 = arith.constant dense<0xFF800000> : vector<128xf32>
    %22 = vector.multi_reduction <maximumf>, %21, %cst_17 [1] : vector<128x128xf32> to vector<128xf32>
    %23 = vector.shape_cast %22 : vector<128xf32> to vector<128x1xf32>
    %c0_18 = arith.constant 0 : index
    %c2_19 = arith.constant 2 : index
    %24 = vector.load %arg7[%c0_18, %c2_19] : memref<128x8xf32, #tpu.memory_space<vmem>>, vector<128x1xf32>
    tpu.vector_store %arg7[%c0_18, %c2_19], %23 {strides = array<i32>} : memref<128x8xf32, #tpu.memory_space<vmem>>, vector<128x1xf32>,
    %cst_20 = arith.constant dense<0.000000e+00> : vector<128xf32>
    %25 = vector.multi_reduction <add>, %21, %cst_20 [1] : vector<128x128xf32> to vector<128xf32>
    %26 = vector.shape_cast %25 : vector<128xf32> to vector<128x1xf32>
    %cst_21 = arith.constant 7.812500e-03 : f32
    %27 = vector.broadcast %cst_21 : f32 to vector<128x1xf32>
    %28 = arith.mulf %26, %27 : vector<128x1xf32>
    %c0_22 = arith.constant 0 : index
    %c6 = arith.constant 6 : index
    %29 = vector.load %arg7[%c0_22, %c6] : memref<128x8xf32, #tpu.memory_space<vmem>>, vector<128x1xf32>
    tpu.vector_store %arg7[%c0_22, %c6], %28 {strides = array<i32>} : memref<128x8xf32, #tpu.memory_space<vmem>>, vector<128x1xf32>,
    %c3 = arith.constant 3 : index
    %c0_23 = arith.constant 0 : index
    %c0_24 = arith.constant 0 : index
    %30 = vector.load %arg1[%c3, %c0_23, %c0_24] : memref<4x128x128xf32, #tpu.memory_space<vmem>>, vector<1x128x128xf32>
    %31 = vector.shape_cast %30 : vector<1x128x128xf32> to vector<128x128xf32>
    %cst_25 = arith.constant dense<0xFF800000> : vector<128xf32>
    %32 = vector.multi_reduction <maximumf>, %31, %cst_25 [1] : vector<128x128xf32> to vector<128xf32>
    %33 = vector.shape_cast %32 : vector<128xf32> to vector<128x1xf32>
    %c0_26 = arith.constant 0 : index
    %c3_27 = arith.constant 3 : index
    %34 = vector.load %arg7[%c0_26, %c3_27] : memref<128x8xf32, #tpu.memory_space<vmem>>, vector<128x1xf32>
    tpu.vector_store %arg7[%c0_26, %c3_27], %33 {strides = array<i32>} : memref<128x8xf32, #tpu.memory_space<vmem>>, vector<128x1xf32>,
    %cst_28 = arith.constant dense<0.000000e+00> : vector<128xf32>
    %35 = vector.multi_reduction <add>, %31, %cst_28 [1] : vector<128x128xf32> to vector<128xf32>
    %36 = vector.shape_cast %35 : vector<128xf32> to vector<128x1xf32>
    %cst_29 = arith.constant 7.812500e-03 : f32
    %37 = vector.broadcast %cst_29 : f32 to vector<128x1xf32>
    %38 = arith.mulf %36, %37 : vector<128x1xf32>
    %c0_30 = arith.constant 0 : index
    %c7 = arith.constant 7 : index
    %39 = vector.load %arg7[%c0_30, %c7] : memref<128x8xf32, #tpu.memory_space<vmem>>, vector<128x1xf32>
    tpu.vector_store %arg7[%c0_30, %c7], %38 {strides = array<i32>} : memref<128x8xf32, #tpu.memory_space<vmem>>, vector<128x1xf32>,
    %c0_31 = arith.constant 0 : index
    %c0_32 = arith.constant 0 : index
    %40 = vector.load %arg4[%c0_31, %c0_32] : memref<128x2xf32, #tpu.memory_space<vmem>>, vector<128x1xf32>
    %c0_33 = arith.constant 0 : index
    %c1_34 = arith.constant 1 : index
    %41 = vector.load %arg4[%c0_33, %c1_34] : memref<128x2xf32, #tpu.memory_space<vmem>>, vector<128x1xf32>
    %c0_35 = arith.constant 0 : index
    %c0_36 = arith.constant 0 : index
    %42 = vector.load %arg2[%c0_35, %c0_36] : memref<128x128xf32, #tpu.memory_space<vmem>>, vector<128x128xf32>
    %c0_37 = arith.constant 0 : index
    %c0_38 = arith.constant 0 : index
    %43 = vector.load %arg7[%c0_37, %c0_38] : memref<128x8xf32, #tpu.memory_space<vmem>>, vector<128x8xf32>
    %cst_39 = arith.constant dense<0.000000e+00> : vector<128x8xf32>
    %44 = tpu.matmul %42, %43, %cst_39 {dimension_numbers = #tpu.dot_dimension_numbers<[1], [0], [0], [1], [0, 0, 1, 1], [], []>} : vector<128x128xf32>, vector<128x8xf32>, vector<128x8xf32> -> vector<128x8xf32>
    %45 = vector.broadcast %40 : vector<128x1xf32> to vector<128x8xf32>
    %46 = arith.addf %44, %45 : vector<128x8xf32>
    %cst_40 = arith.constant 0.000000e+00 : f32
    %47 = vector.broadcast %cst_40 : f32 to vector<128x8xf32>
    %48 = arith.maximumf %46, %47 : vector<128x8xf32>
    %c0_41 = arith.constant 0 : index
    %c0_42 = arith.constant 0 : index
    %49 = vector.load %arg3[%c0_41, %c0_42] : memref<128x128xf32, #tpu.memory_space<vmem>>, vector<128x128xf32>
    %cst_43 = arith.constant dense<0.000000e+00> : vector<128x8xf32>
    %50 = tpu.matmul %49, %48, %cst_43 {dimension_numbers = #tpu.dot_dimension_numbers<[1], [0], [0], [1], [0, 0, 1, 1], [], []>} : vector<128x128xf32>, vector<128x8xf32>, vector<128x8xf32> -> vector<128x8xf32>
    %51 = vector.broadcast %41 : vector<128x1xf32> to vector<128x8xf32>
    %52 = arith.addf %50, %51 : vector<128x8xf32>
    %53 = vector.extract_strided_slice %52 {offsets = [0, 0], sizes = [128, 4], strides = [1, 1]} : vector<128x8xf32> to vector<128x4xf32>
    %54 = vector.extract_strided_slice %52 {offsets = [0, 4], sizes = [128, 4], strides = [1, 1]} : vector<128x8xf32> to vector<128x4xf32>
    %55 = arith.addf %53, %54 : vector<128x4xf32>
    %56 = arith.negf %55 : vector<128x4xf32>
    %57 = math.exp %56 : vector<128x4xf32>
    %cst_44 = arith.constant 1.000000e+00 : f32
    %58 = vector.broadcast %cst_44 : f32 to vector<128x4xf32>
    %59 = arith.addf %58, %57 : vector<128x4xf32>
    %60 = arith.divf %58, %59 : vector<128x4xf32>
    %c0_45 = arith.constant 0 : index
    %61 = memref.load %arg5[%c0_45] : memref<3xf32, #tpu.memory_space<smem>>
    %c1_46 = arith.constant 1 : index
    %62 = memref.load %arg5[%c1_46] : memref<3xf32, #tpu.memory_space<smem>>
    %c2_47 = arith.constant 2 : index
    %63 = memref.load %arg5[%c2_47] : memref<3xf32, #tpu.memory_space<smem>>
    %c0_48 = arith.constant 0 : index
    %c0_49 = arith.constant 0 : index
    %c0_50 = arith.constant 0 : index
    %64 = vector.load %arg1[%c0_48, %c0_49, %c0_50] : memref<4x128x128xf32, #tpu.memory_space<vmem>>, vector<1x128x128xf32>
    %65 = vector.shape_cast %64 : vector<1x128x128xf32> to vector<128x128xf32>
    %66 = vector.extract_strided_slice %60 {offsets = [0, 0], sizes = [128, 1], strides = [1, 1]} : vector<128x4xf32> to vector<128x1xf32>
    %67 = vector.broadcast %66 : vector<128x1xf32> to vector<128x128xf32>
    %68 = arith.mulf %65, %67 : vector<128x128xf32>
    %cst_51 = arith.constant dense<0xFF800000> : vector<128xf32>
    %69 = vector.multi_reduction <maximumf>, %68, %cst_51 [0] : vector<128x128xf32> to vector<128xf32>
    %70 = vector.shape_cast %69 : vector<128xf32> to vector<1x128xf32>
    %cst_52 = arith.constant dense<0.000000e+00> : vector<128xf32>
    %71 = vector.multi_reduction <add>, %68, %cst_52 [0] : vector<128x128xf32> to vector<128xf32>
    %72 = vector.shape_cast %71 : vector<128xf32> to vector<1x128xf32>
    %cst_53 = arith.constant 7.812500e-03 : f32
    %73 = vector.broadcast %cst_53 : f32 to vector<1x128xf32>
    %74 = arith.mulf %72, %73 : vector<1x128xf32>
    %75 = vector.broadcast %61 : f32 to vector<1x128xf32>
    %76 = arith.mulf %75, %70 : vector<1x128xf32>
    %77 = vector.broadcast %62 : f32 to vector<1x128xf32>
    %78 = arith.mulf %77, %74 : vector<1x128xf32>
    %79 = arith.addf %76, %78 : vector<1x128xf32>
    %80 = vector.broadcast %63 : f32 to vector<1x128xf32>
    %81 = arith.addf %79, %80 : vector<1x128xf32>
    %82 = arith.negf %81 : vector<1x128xf32>
    %83 = math.exp %82 : vector<1x128xf32>
    %cst_54 = arith.constant 1.000000e+00 : f32
    %84 = vector.broadcast %cst_54 : f32 to vector<1x128xf32>
    %85 = arith.addf %84, %83 : vector<1x128xf32>
    %86 = arith.divf %84, %85 : vector<1x128xf32>
    %87 = vector.broadcast %86 : vector<1x128xf32> to vector<128x128xf32>
    %88 = arith.mulf %68, %87 : vector<128x128xf32>
    %c0_55 = arith.constant 0 : index
    %c0_56 = arith.constant 0 : index
    %c0_57 = arith.constant 0 : index
    %89 = vector.load %arg6[%c0_55, %c0_56, %c0_57] : memref<4x128x128xf32, #tpu.memory_space<vmem>>, vector<1x128x128xf32>
    %90 = vector.shape_cast %89 : vector<1x128x128xf32> to vector<128x128xf32>
    %91 = vector.shape_cast %88 : vector<128x128xf32> to vector<1x128x128xf32>
    tpu.vector_store %arg6[%c0_55, %c0_56, %c0_57], %91 {strides = array<i32>} : memref<4x128x128xf32, #tpu.memory_space<vmem>>, vector<1x128x128xf32>,
    %c1_58 = arith.constant 1 : index
    %c0_59 = arith.constant 0 : index
    %c0_60 = arith.constant 0 : index
    %92 = vector.load %arg1[%c1_58, %c0_59, %c0_60] : memref<4x128x128xf32, #tpu.memory_space<vmem>>, vector<1x128x128xf32>
    %93 = vector.shape_cast %92 : vector<1x128x128xf32> to vector<128x128xf32>
    %94 = vector.extract_strided_slice %60 {offsets = [0, 1], sizes = [128, 1], strides = [1, 1]} : vector<128x4xf32> to vector<128x1xf32>
    %95 = vector.broadcast %94 : vector<128x1xf32> to vector<128x128xf32>
    %96 = arith.mulf %93, %95 : vector<128x128xf32>
    %cst_61 = arith.constant dense<0xFF800000> : vector<128xf32>
    %97 = vector.multi_reduction <maximumf>, %96, %cst_61 [0] : vector<128x128xf32> to vector<128xf32>
    %98 = vector.shape_cast %97 : vector<128xf32> to vector<1x128xf32>
    %cst_62 = arith.constant dense<0.000000e+00> : vector<128xf32>
    %99 = vector.multi_reduction <add>, %96, %cst_62 [0] : vector<128x128xf32> to vector<128xf32>
    %100 = vector.shape_cast %99 : vector<128xf32> to vector<1x128xf32>
    %cst_63 = arith.constant 7.812500e-03 : f32
    %101 = vector.broadcast %cst_63 : f32 to vector<1x128xf32>
    %102 = arith.mulf %100, %101 : vector<1x128xf32>
    %103 = vector.broadcast %61 : f32 to vector<1x128xf32>
    %104 = arith.mulf %103, %98 : vector<1x128xf32>
    %105 = vector.broadcast %62 : f32 to vector<1x128xf32>
    %106 = arith.mulf %105, %102 : vector<1x128xf32>
    %107 = arith.addf %104, %106 : vector<1x128xf32>
    %108 = vector.broadcast %63 : f32 to vector<1x128xf32>
    %109 = arith.addf %107, %108 : vector<1x128xf32>
    %110 = arith.negf %109 : vector<1x128xf32>
    %111 = math.exp %110 : vector<1x128xf32>
    %cst_64 = arith.constant 1.000000e+00 : f32
    %112 = vector.broadcast %cst_64 : f32 to vector<1x128xf32>
    %113 = arith.addf %112, %111 : vector<1x128xf32>
    %114 = arith.divf %112, %113 : vector<1x128xf32>
    %115 = vector.broadcast %114 : vector<1x128xf32> to vector<128x128xf32>
    %116 = arith.mulf %96, %115 : vector<128x128xf32>
    %c1_65 = arith.constant 1 : index
    %c0_66 = arith.constant 0 : index
    %c0_67 = arith.constant 0 : index
    %117 = vector.load %arg6[%c1_65, %c0_66, %c0_67] : memref<4x128x128xf32, #tpu.memory_space<vmem>>, vector<1x128x128xf32>
    %118 = vector.shape_cast %117 : vector<1x128x128xf32> to vector<128x128xf32>
    %119 = vector.shape_cast %116 : vector<128x128xf32> to vector<1x128x128xf32>
    tpu.vector_store %arg6[%c1_65, %c0_66, %c0_67], %119 {strides = array<i32>} : memref<4x128x128xf32, #tpu.memory_space<vmem>>, vector<1x128x128xf32>,
    %c2_68 = arith.constant 2 : index
    %c0_69 = arith.constant 0 : index
    %c0_70 = arith.constant 0 : index
    %120 = vector.load %arg1[%c2_68, %c0_69, %c0_70] : memref<4x128x128xf32, #tpu.memory_space<vmem>>, vector<1x128x128xf32>
    %121 = vector.shape_cast %120 : vector<1x128x128xf32> to vector<128x128xf32>
    %122 = vector.extract_strided_slice %60 {offsets = [0, 2], sizes = [128, 1], strides = [1, 1]} : vector<128x4xf32> to vector<128x1xf32>
    %123 = vector.broadcast %122 : vector<128x1xf32> to vector<128x128xf32>
    %124 = arith.mulf %121, %123 : vector<128x128xf32>
    %cst_71 = arith.constant dense<0xFF800000> : vector<128xf32>
    %125 = vector.multi_reduction <maximumf>, %124, %cst_71 [0] : vector<128x128xf32> to vector<128xf32>
    %126 = vector.shape_cast %125 : vector<128xf32> to vector<1x128xf32>
    %cst_72 = arith.constant dense<0.000000e+00> : vector<128xf32>
    %127 = vector.multi_reduction <add>, %124, %cst_72 [0] : vector<128x128xf32> to vector<128xf32>
    %128 = vector.shape_cast %127 : vector<128xf32> to vector<1x128xf32>
    %cst_73 = arith.constant 7.812500e-03 : f32
    %129 = vector.broadcast %cst_73 : f32 to vector<1x128xf32>
    %130 = arith.mulf %128, %129 : vector<1x128xf32>
    %131 = vector.broadcast %61 : f32 to vector<1x128xf32>
    %132 = arith.mulf %131, %126 : vector<1x128xf32>
    %133 = vector.broadcast %62 : f32 to vector<1x128xf32>
    %134 = arith.mulf %133, %130 : vector<1x128xf32>
    %135 = arith.addf %132, %134 : vector<1x128xf32>
    %136 = vector.broadcast %63 : f32 to vector<1x128xf32>
    %137 = arith.addf %135, %136 : vector<1x128xf32>
    %138 = arith.negf %137 : vector<1x128xf32>
    %139 = math.exp %138 : vector<1x128xf32>
    %cst_74 = arith.constant 1.000000e+00 : f32
    %140 = vector.broadcast %cst_74 : f32 to vector<1x128xf32>
    %141 = arith.addf %140, %139 : vector<1x128xf32>
    %142 = arith.divf %140, %141 : vector<1x128xf32>
    %143 = vector.broadcast %142 : vector<1x128xf32> to vector<128x128xf32>
    %144 = arith.mulf %124, %143 : vector<128x128xf32>
    %c2_75 = arith.constant 2 : index
    %c0_76 = arith.constant 0 : index
    %c0_77 = arith.constant 0 : index
    %145 = vector.load %arg6[%c2_75, %c0_76, %c0_77] : memref<4x128x128xf32, #tpu.memory_space<vmem>>, vector<1x128x128xf32>
    %146 = vector.shape_cast %145 : vector<1x128x128xf32> to vector<128x128xf32>
    %147 = vector.shape_cast %144 : vector<128x128xf32> to vector<1x128x128xf32>
    tpu.vector_store %arg6[%c2_75, %c0_76, %c0_77], %147 {strides = array<i32>} : memref<4x128x128xf32, #tpu.memory_space<vmem>>, vector<1x128x128xf32>,
    %c3_78 = arith.constant 3 : index
    %c0_79 = arith.constant 0 : index
    %c0_80 = arith.constant 0 : index
    %148 = vector.load %arg1[%c3_78, %c0_79, %c0_80] : memref<4x128x128xf32, #tpu.memory_space<vmem>>, vector<1x128x128xf32>
    %149 = vector.shape_cast %148 : vector<1x128x128xf32> to vector<128x128xf32>
    %150 = vector.extract_strided_slice %60 {offsets = [0, 3], sizes = [128, 1], strides = [1, 1]} : vector<128x4xf32> to vector<128x1xf32>
    %151 = vector.broadcast %150 : vector<128x1xf32> to vector<128x128xf32>
    %152 = arith.mulf %149, %151 : vector<128x128xf32>
    %cst_81 = arith.constant dense<0xFF800000> : vector<128xf32>
    %153 = vector.multi_reduction <maximumf>, %152, %cst_81 [0] : vector<128x128xf32> to vector<128xf32>
    %154 = vector.shape_cast %153 : vector<128xf32> to vector<1x128xf32>
    %cst_82 = arith.constant dense<0.000000e+00> : vector<128xf32>
    %155 = vector.multi_reduction <add>, %152, %cst_82 [0] : vector<128x128xf32> to vector<128xf32>
    %156 = vector.shape_cast %155 : vector<128xf32> to vector<1x128xf32>
    %cst_83 = arith.constant 7.812500e-03 : f32
    %157 = vector.broadcast %cst_83 : f32 to vector<1x128xf32>
    %158 = arith.mulf %156, %157 : vector<1x128xf32>
    %159 = vector.broadcast %61 : f32 to vector<1x128xf32>
    %160 = arith.mulf %159, %154 : vector<1x128xf32>
    %161 = vector.broadcast %62 : f32 to vector<1x128xf32>
    %162 = arith.mulf %161, %158 : vector<1x128xf32>
    %163 = arith.addf %160, %162 : vector<1x128xf32>
    %164 = vector.broadcast %63 : f32 to vector<1x128xf32>
    %165 = arith.addf %163, %164 : vector<1x128xf32>
    %166 = arith.negf %165 : vector<1x128xf32>
    %167 = math.exp %166 : vector<1x128xf32>
    %cst_84 = arith.constant 1.000000e+00 : f32
    %168 = vector.broadcast %cst_84 : f32 to vector<1x128xf32>
    %169 = arith.addf %168, %167 : vector<1x128xf32>
    %170 = arith.divf %168, %169 : vector<1x128xf32>
    %171 = vector.broadcast %170 : vector<1x128xf32> to vector<128x128xf32>
    %172 = arith.mulf %152, %171 : vector<128x128xf32>
    %c3_85 = arith.constant 3 : index
    %c0_86 = arith.constant 0 : index
    %c0_87 = arith.constant 0 : index
    %173 = vector.load %arg6[%c3_85, %c0_86, %c0_87] : memref<4x128x128xf32, #tpu.memory_space<vmem>>, vector<1x128x128xf32>
    %174 = vector.shape_cast %173 : vector<1x128x128xf32> to vector<128x128xf32>
    %175 = vector.shape_cast %172 : vector<128x128xf32> to vector<1x128x128xf32>
    tpu.vector_store %arg6[%c3_85, %c0_86, %c0_87], %175 {strides = array<i32>} : memref<4x128x128xf32, #tpu.memory_space<vmem>>, vector<1x128x128xf32>,
    return
  }
  func.func @transform_0(%arg0: i32) -> (i32, i32, i32) {
    %c0_i32 = arith.constant 0 : i32
    %c0_i32_0 = arith.constant 0 : i32
    %c0_i32_1 = arith.constant 0 : i32
    return %arg0, %c0_i32, %c0_i32_0 : i32, i32, i32
  }
  func.func @transform_1(%arg0: i32) -> (i32, i32) {
    %c0_i32 = arith.constant 0 : i32
    %c0_i32_0 = arith.constant 0 : i32
    %c0_i32_1 = arith.constant 0 : i32
    return %c0_i32, %c0_i32_0 : i32, i32
  }
  func.func @transform_2(%arg0: i32) -> (i32, i32) {
    %c0_i32 = arith.constant 0 : i32
    %c0_i32_0 = arith.constant 0 : i32
    %c0_i32_1 = arith.constant 0 : i32
    return %c0_i32, %c0_i32_0 : i32, i32
  }
  func.func @transform_3(%arg0: i32) -> (i32, i32) {
    %c0_i32 = arith.constant 0 : i32
    %c0_i32_0 = arith.constant 0 : i32
    %c0_i32_1 = arith.constant 0 : i32
    return %c0_i32, %c0_i32_0 : i32, i32
  }
  func.func @transform_4(%arg0: i32) -> i32 {
    %c0_i32 = arith.constant 0 : i32
    %c0_i32_0 = arith.constant 0 : i32
    return %c0_i32 : i32
  }
  func.func @transform_5(%arg0: i32) -> (i32, i32, i32) {
    %c0_i32 = arith.constant 0 : i32
    %c0_i32_0 = arith.constant 0 : i32
    %c0_i32_1 = arith.constant 0 : i32
    return %arg0, %c0_i32, %c0_i32_0 : i32, i32, i32
  }
}

</mosaic_0001>

<llo_original>
// kernel: cbam_forward.1
$region0: #{cbam_forward.1}
  #allocation0 [shape = 'u32[]', space=smem, size = 0x4, offset = 0x4, fixed_abs, tag = 'smem constant byte address 0x4 - core index']
  #allocation1 [shape = 'u32[72,128]{1,0:T(1,128)}', space=vmem, size = 0x9000, scoped, tag = 'internal scratch']
  #allocation2 [shape = 'f32[128,8]{1,0:T(8,128)}', space=vmem, size = 0x10000, scoped, tag = 'scratch operand']
  %s0 = inlined_call_operand.hbm [shape: f32[8,128,128], index: 0, kind: input, shape index: {}]
  %s1 = inlined_call_operand.vmem [shape: f32[128,128], index: 1, kind: input, shape index: {}]
  %s2 = inlined_call_operand.hbm [shape: f32[128,128], index: 2, kind: input, shape index: {}]
  %s3 = inlined_call_operand.vmem [shape: f32[128,2], index: 3, kind: input, shape index: {}]
  %s4 = inlined_call_operand.vmem [shape: f32[3], index: 4, kind: input, shape index: {}]
  %s5 = inlined_call_operand.hbm [shape: f32[8,128,128], index: 5, kind: output, shape index: {}]
  %s6 = sld [smem:[#allocation0]]
  $region65: #{cbam_forward.1} parent=0
    _
  %s8 = ssub.s32 1, %s6
  %s9 = scalar_select 0, %s8, %s6
  $region1: #{cbam_forward.1} parent=0
    #allocation3 [shape = 'u8[524288]{0}', space=vmem, size = 0x80000, scoped, tag = 'input window, operand 0']
    #allocation4 [shape = 's32[2]{0}', space=sflag, size = 0x8, scoped, tag = 'scoped memory for cbam_forward.1']
    #allocation5 [shape = 's32[2]{0}', space=sflag, size = 0x8, scoped, tag = 'scoped memory for cbam_forward.1']
    #allocation6 [shape = 's32[2]{0}', space=sflag, size = 0x8, scoped, tag = 'scoped memory for cbam_forward.1']
    #allocation7 [shape = 'u8[65536]{0}', space=vmem, size = 0x10000, scoped, tag = 'input window, operand 2, single buffered']
    #allocation8 [shape = 's32[1]{0}', space=sflag, size = 0x4, scoped, tag = 'scoped memory for cbam_forward.1']
    #allocation9 [shape = 'u8[512]{0}', space=smem, size = 0x200, scoped, tag = 'input window, operand 4, single buffered']
    #allocation10 [shape = 'u8[524288]{0}', space=vmem, size = 0x80000, scoped, tag = 'output window, operand 0']
    %10 = vsyncpa [#allocation4], 0
    %s11 = scalar_lea.sflag [#allocation4], 1
    %12 = vsyncpa %s11, 0
    %13 = vsyncpa [#allocation8], 0
    %14 = vsyncpa [#allocation6], 0
    %15 = vsyncpa [#allocation5], 0
    %s16 = scalar_lea.sflag [#allocation5], 1
    %17 = vsyncpa %s16, 0
    loop: start=0, step=1, limit=4
    $region2: #{cbam_forward.1} parent=1 // loop_pre_header
      _
    $region3: #{cbam_forward.1} parent=1 // loop_header
      %s19 = sphi 0, %s23
      %p20 = scmp.ge.s32.totalorder %s19, 4
      %s29 = sphi 0, %s31
      %s32 = sphi 0, %s29
      %s33 = sphi 0, %s32
      %s49 = sphi 0, %s33
      %s53 = sphi 0, %s53
      %s55 = sphi 0, %s53
      %s56 = sphi 0, %s55
      %s70 = sphi 0, %s56
      %s74 = sphi 0, %s74
      %s76 = sphi 0, %s74
      %s77 = sphi 0, %s76
      %s91 = sphi 0, %s77
      %s95 = sphi 0, %s95
      %s97 = sphi 0, %s95
      %s98 = sphi 0, %s97
      %s112 = sphi 0, %s98
      %s116 = sphi 0, %s116
      %s118 = sphi 0, %s116
      %s119 = sphi 0, %s118
      %s133 = sphi 0, %s119
      %s139 = sphi 0, %s141
      %s142 = sphi 0, %s139
      %s143 = sphi 0, %s142
      %s159 = sphi 0, %s143
    $region4: #{cbam_forward.1} parent=1 // loop_header_branch
      %22 = sbr.rel (%p20) target = $region8
    $region5: #{cbam_forward.1} parent=1 // loop_body
      %s24 = ssub.s32 %s19, 1
      %s25 = ssub.s32 %s19, 2
      %s26 = sadd.s32 %s19, 1
      %s27 = ssub.s32 %s19, %s26
      %p28 = scmp.eq.s32.totalorder %s27, 0
      %s30 = sadd.s32 %s29, 1
      %s31 = scalar_select %p28, %s29, %s30
      %p34 = pneg %p28
      %p35 = scmp.eq.s32.totalorder %s19, 1
      %p36 = por %p34, %p35
      %p37 = scmp.ne.s32.totalorder %s29, %s32
      %p38 = scmp.eq.s32.totalorder %s19, 0
      %p39 = por %p37, %p38
      %p40 = scmp.ne.s32.totalorder %s29, %s32
      %p41 = scmp.eq.s32.totalorder %s24, 1
      %p42 = por %p40, %p41
      %p43 = scmp.ne.s32.totalorder %s32, %s33
      %p44 = scmp.eq.s32.totalorder %s24, 0
      %p45 = por %p43, %p44
      %p46 = scmp.ne.s32.totalorder %s32, %s33
      %p47 = scmp.eq.s32.totalorder %s25, 1
      %p48 = por %p46, %p47
      %p50 = scmp.ne.s32.totalorder %s33, %s49
      %p51 = scmp.eq.s32.totalorder %s25, 0
      %p52 = por %p50, %p51
      %s54 = sadd.s32 %s53, 1
      %p57 = scmp.eq.s32.totalorder %s19, 1
      %p58 = scmp.ne.s32.totalorder %s53, %s55
      %p59 = scmp.eq.s32.totalorder %s19, 0
      %p60 = por %p58, %p59
      %p61 = scmp.ne.s32.totalorder %s53, %s55
      %p62 = scmp.eq.s32.totalorder %s24, 1
      %p63 = por %p61, %p62
      %p64 = scmp.ne.s32.totalorder %s55, %s56
      %p65 = scmp.eq.s32.totalorder %s24, 0
      %p66 = por %p64, %p65
      %p67 = scmp.ne.s32.totalorder %s55, %s56
      %p68 = scmp.eq.s32.totalorder %s25, 1
      %p69 = por %p67, %p68
      %p71 = scmp.ne.s32.totalorder %s56, %s70
      %p72 = scmp.eq.s32.totalorder %s25, 0
      %p73 = por %p71, %p72
      %s75 = sadd.s32 %s74, 1
      %p78 = scmp.eq.s32.totalorder %s19, 1
      %p79 = scmp.ne.s32.totalorder %s74, %s76
      %p80 = scmp.eq.s32.totalorder %s19, 0
      %p81 = por %p79, %p80
      %p82 = scmp.ne.s32.totalorder %s74, %s76
      %p83 = scmp.eq.s32.totalorder %s24, 1
      %p84 = por %p82, %p83
      %p85 = scmp.ne.s32.totalorder %s76, %s77
      %p86 = scmp.eq.s32.totalorder %s24, 0
      %p87 = por %p85, %p86
      %p88 = scmp.ne.s32.totalorder %s76, %s77
      %p89 = scmp.eq.s32.totalorder %s25, 1
      %p90 = por %p88, %p89
      %p92 = scmp.ne.s32.totalorder %s77, %s91
      %p93 = scmp.eq.s32.totalorder %s25, 0
      %p94 = por %p92, %p93
      %s96 = sadd.s32 %s95, 1
      %p99 = scmp.eq.s32.totalorder %s19, 1
      %p100 = scmp.ne.s32.totalorder %s95, %s97
      %p101 = scmp.eq.s32.totalorder %s19, 0
      %p102 = por %p100, %p101
      %p103 = scmp.ne.s32.totalorder %s95, %s97
      %p104 = scmp.eq.s32.totalorder %s24, 1
      %p105 = por %p103, %p104
      %p106 = scmp.ne.s32.totalorder %s97, %s98
      %p107 = scmp.eq.s32.totalorder %s24, 0
      %p108 = por %p106, %p107
      %p109 = scmp.ne.s32.totalorder %s97, %s98
      %p110 = scmp.eq.s32.totalorder %s25, 1
      %p111 = por %p109, %p110
      %p113 = scmp.ne.s32.totalorder %s98, %s112
      %p114 = scmp.eq.s32.totalorder %s25, 0
      %p115 = por %p113, %p114
      %s117 = sadd.s32 %s116, 1
      %p120 = scmp.eq.s32.totalorder %s19, 1
      %p121 = scmp.ne.s32.totalorder %s116, %s118
      %p122 = scmp.eq.s32.totalorder %s19, 0
      %p123 = por %p121, %p122
      %p124 = scmp.ne.s32.totalorder %s116, %s118
      %p125 = scmp.eq.s32.totalorder %s24, 1
      %p126 = por %p124, %p125
      %p127 = scmp.ne.s32.totalorder %s118, %s119
      %p128 = scmp.eq.s32.totalorder %s24, 0
      %p129 = por %p127, %p128
      %p130 = scmp.ne.s32.totalorder %s118, %s119
      %p131 = scmp.eq.s32.totalorder %s25, 1
      %p132 = por %p130, %p131
      %p134 = scmp.ne.s32.totalorder %s119, %s133
      %p135 = scmp.eq.s32.totalorder %s25, 0
      %p136 = por %p134, %p135
      %s137 = ssub.s32 %s19, %s26
      %p138 = scmp.eq.s32.totalorder %s137, 0
      %s140 = sadd.s32 %s139, 1
      %s141 = scalar_select %p138, %s139, %s140
      %p144 = pneg %p138
      %p145 = scmp.eq.s32.totalorder %s19, 1
      %p146 = por %p144, %p145
      %p147 = scmp.ne.s32.totalorder %s139, %s142
      %p148 = scmp.eq.s32.totalorder %s19, 0
      %p149 = por %p147, %p148
      %p150 = scmp.ne.s32.totalorder %s139, %s142
      %p151 = scmp.eq.s32.totalorder %s24, 1
      %p152 = por %p150, %p151
      %p153 = scmp.ne.s32.totalorder %s142, %s143
      %p154 = scmp.eq.s32.totalorder %s24, 0
      %p155 = por %p153, %p154
      %p156 = scmp.ne.s32.totalorder %s142, %s143
      %p157 = scmp.eq.s32.totalorder %s25, 1
      %p158 = por %p156, %p157
      %p160 = scmp.ne.s32.totalorder %s143, %s159
      %p161 = scmp.eq.s32.totalorder %s25, 0
      %p162 = por %p160, %p161
      %p163 = scmp.le.s32.totalorder 1, %s19
      %p164 = scmp.lt.s32.totalorder %s19, 3
      %p165 = pnand %p163, %p164
      %p166 = pneg %p165
      // Predicated region
      $region9: #{cbam_forward.1} parent=5 // pred_check
        _
      $region10: #{cbam_forward.1} parent=5 // pred_check_branch
        %168 = sbr.rel (%p165) target = $region12
      $region11: #{cbam_forward.1} parent=5 // pred_region
        %s169 = ssub.s32 %s19, 1
        // Predicated region
        $region13: #{cbam_forward.1} parent=11 // pred_check
          %p170 = pneg %p66
        $region14: #{cbam_forward.1} parent=11 // pred_check_branch
          %172 = sbr.rel (%p170) target = $region16
        $region15: #{cbam_forward.1} parent=11 // pred_region
          _
        $region16: #{cbam_forward.1} parent=11 // pred_fallthru
          _
        // Predicated region
        $region17: #{cbam_forward.1} parent=11 // pred_check
          %p173 = pneg %p87
        $region18: #{cbam_forward.1} parent=11 // pred_check_branch
          %175 = sbr.rel (%p173) target = $region20
        $region19: #{cbam_forward.1} parent=11 // pred_region
          %177 = vsyncadd [#allocation8], 0
          %s178 = sshll.u32 %s2, 4
          %s179 = int_to_ptr.hbm [resolvable:$true] %s178
          %s180 = sshll.u32 [#allocation7], 4
          %s181 = int_to_ptr.vmem [resolvable:$true] %s180
          %186 = dma.hbm_to_vmem [thread:$0]  %s179, 2048, %s181, [#allocation8], 128, 128, 8
        $region20: #{cbam_forward.1} parent=11 // pred_fallthru
          _
        // Predicated region
        $region21: #{cbam_forward.1} parent=11 // pred_check
          %p187 = pneg %p108
        $region22: #{cbam_forward.1} parent=11 // pred_check_branch
          %189 = sbr.rel (%p187) target = $region24
        $region23: #{cbam_forward.1} parent=11 // pred_region
          _
        $region24: #{cbam_forward.1} parent=11 // pred_fallthru
          _
        // Predicated region
        $region25: #{cbam_forward.1} parent=11 // pred_check
          %p190 = pneg %p129
        $region26: #{cbam_forward.1} parent=11 // pred_check_branch
          %192 = sbr.rel (%p190) target = $region28
        $region27: #{cbam_forward.1} parent=11 // pred_region
          %194 = vsyncadd [#allocation6], 0
          %s196 = sshll.u32 %s4, 4
          %s197 = int_to_ptr.vmem [resolvable:$true] %s196
          %199 = dma.vmem_to_smem %s197, 16, [#allocation9], [#allocation6]
        $region28: #{cbam_forward.1} parent=11 // pred_fallthru
          _
      $region12: #{cbam_forward.1} parent=5 // pred_fallthru
        _
      %p200 = scmp.lt.s32.totalorder %s19, 2
      // Predicated region
      $region29: #{cbam_forward.1} parent=5 // pred_check
        %p201 = pneg %p200
      $region30: #{cbam_forward.1} parent=5 // pred_check_branch
        %203 = sbr.rel (%p201) target = $region32
      $region31: #{cbam_forward.1} parent=5 // pred_region
        // Predicated region
        $region33: #{cbam_forward.1} parent=31 // pred_check
          %p204 = pneg %p39
        $region34: #{cbam_forward.1} parent=31 // pred_check_branch
          %206 = sbr.rel (%p204) target = $region36
        $region35: #{cbam_forward.1} parent=31 // pred_region
          %s207 = sand.u32 %s29, 1
          %s208 = scalar_lea.sflag [#allocation4], %s207
          %s209 = sand.u32 %s29, 1
          %s210 = smul.addr %s209, 512
          %s211 = scalar_lea.vmem [#allocation3], %s210
          %s212 = smul.u32 4, %s19
          %214 = vsyncadd %s208, 0
          %s215 = smul.addr %s212, 16
          %s216 = smul.addr %s215, 8
          %s217 = scalar_lea.hbm %s0, %s216
          %s218 = sshll.u32 %s217, 4
          %s219 = int_to_ptr.hbm [resolvable:$true] %s218
          %s220 = sshll.u32 %s211, 4
          %s221 = int_to_ptr.vmem [resolvable:$true] %s220
          %226 = dma.hbm_to_vmem [thread:$0]  %s219, 8192, %s221, %s208, 128, 128, 8
        $region36: #{cbam_forward.1} parent=31 // pred_fallthru
          _
      $region32: #{cbam_forward.1} parent=5 // pred_fallthru
        _
      %p227 = scmp.le.s32.totalorder 1, %s19
      %p228 = scmp.lt.s32.totalorder %s19, 3
      %p229 = pnand %p227, %p228
      %p230 = pneg %p229
      // Predicated region
      $region37: #{cbam_forward.1} parent=5 // pred_check
        _
      $region38: #{cbam_forward.1} parent=5 // pred_check_branch
        %232 = sbr.rel (%p229) target = $region40
      $region39: #{cbam_forward.1} parent=5 // pred_region
        %s233 = ssub.s32 %s19, 1
        %s234 = sand.u32 %s32, 1
        %s235 = scalar_lea.sflag [#allocation4], %s234
        %s236 = sand.u32 %s32, 1
        %s237 = smul.addr %s236, 512
        %s238 = scalar_lea.vmem [#allocation3], %s237
        // Predicated region
        $region41: #{cbam_forward.1} parent=39 // pred_check
          %p239 = pneg %p45
        $region42: #{cbam_forward.1} parent=39 // pred_check_branch
          %241 = sbr.rel (%p239) target = $region44
        $region43: #{cbam_forward.1} parent=39 // pred_region
          %243 = dma.done %s235, 8192
        $region44: #{cbam_forward.1} parent=39 // pred_fallthru
          _
        // Predicated region
        $region45: #{cbam_forward.1} parent=39 // pred_check
          %p244 = pneg %p87
        $region46: #{cbam_forward.1} parent=39 // pred_check_branch
          %246 = sbr.rel (%p244) target = $region48
        $region47: #{cbam_forward.1} parent=39 // pred_region
          %248 = dma.done [#allocation8], 2048
        $region48: #{cbam_forward.1} parent=39 // pred_fallthru
          _
        // Predicated region
        $region49: #{cbam_forward.1} parent=39 // pred_check
          %p249 = pneg %p129
        $region50: #{cbam_forward.1} parent=39 // pred_check_branch
          %251 = sbr.rel (%p249) target = $region52
        $region51: #{cbam_forward.1} parent=39 // pred_region
          %253 = dma.done [#allocation6], 16
        $region52: #{cbam_forward.1} parent=39 // pred_fallthru
          _
        %254 = sfence
        %s255 = sand.u32 %s32, 1
        %s256 = scalar_lea.sflag [#allocation4], %s255
        %s257 = sand.u32 %s32, 1
        %s258 = smul.addr %s257, 512
        %s259 = scalar_lea.vmem [#allocation3], %s258
        %p260 = pneg %p45
        %p261 = pneg %p42
        %p262 = pneg %p66
        %p263 = pneg %p63
        %p264 = pneg %p87
        %p265 = pneg %p84
        %p266 = pneg %p108
        %p267 = pneg %p105
        %p268 = pneg %p129
        %p269 = pneg %p126
        %p270 = pneg %p155
        %p271 = pneg %p152
        %s272 = sand.u32 %s142, 1
        %s273 = scalar_lea.sflag [#allocation5], %s272
        %s274 = sand.u32 %s142, 1
        %s275 = smul.addr %s274, 512
        %s276 = scalar_lea.vmem [#allocation10], %s275
        %s277 = smul.u32 4, %s24
        %s278 = smul.u32 4, %s24
        %v279 = vld [vmem:[%s238] sm:$0xff]
        %v280 = vld [vmem:[%s238 + $0x8] sm:$0xff]
        %v281 = vld [vmem:[%s238 + $0x10] sm:$0xff]
        %v282 = vld [vmem:[%s238 + $0x18] sm:$0xff]
        %v283 = vld [vmem:[%s238 + $0x20] sm:$0xff]
        %v284 = vld [vmem:[%s238 + $0x28] sm:$0xff]
        %v285 = vld [vmem:[%s238 + $0x30] sm:$0xff]
        %v286 = vld [vmem:[%s238 + $0x38] sm:$0xff]
        %v287 = vld [vmem:[%s238 + $0x40] sm:$0xff]
        %v288 = vld [vmem:[%s238 + $0x48] sm:$0xff]
        %v289 = vld [vmem:[%s238 + $0x50] sm:$0xff]
        %v290 = vld [vmem:[%s238 + $0x58] sm:$0xff]
        %v291 = vld [vmem:[%s238 + $0x60] sm:$0xff]
        %v292 = vld [vmem:[%s238 + $0x68] sm:$0xff]
        %v293 = vld [vmem:[%s238 + $0x70] sm:$0xff]
        %v294 = vld [vmem:[%s238 + $0x78] sm:$0xff]
        %295 = vmax.xlane.f32.xlu0 %v279
        %v296 = vpop.xlane.xlu0 %295
        %297 = vmax.xlane.f32.xlu0 %v280
        %v298 = vpop.xlane.xlu0 %297
        %299 = vmax.xlane.f32.xlu0 %v281
        %v300 = vpop.xlane.xlu0 %299
        %301 = vmax.xlane.f32.xlu0 %v282
        %v302 = vpop.xlane.xlu0 %301
        %303 = vmax.xlane.f32.xlu0 %v283
        %v304 = vpop.xlane.xlu0 %303
        %305 = vmax.xlane.f32.xlu0 %v284
        %v306 = vpop.xlane.xlu0 %305
        %307 = vmax.xlane.f32.xlu0 %v285
        %v308 = vpop.xlane.xlu0 %307
        %309 = vmax.xlane.f32.xlu0 %v286
        %v310 = vpop.xlane.xlu0 %309
        %311 = vmax.xlane.f32.xlu0 %v287
        %v312 = vpop.xlane.xlu0 %311
        %313 = vmax.xlane.f32.xlu0 %v288
        %v314 = vpop.xlane.xlu0 %313
        %315 = vmax.xlane.f32.xlu0 %v289
        %v316 = vpop.xlane.xlu0 %315
        %317 = vmax.xlane.f32.xlu0 %v290
        %v318 = vpop.xlane.xlu0 %317
        %319 = vmax.xlane.f32.xlu0 %v291
        %v320 = vpop.xlane.xlu0 %319
        %321 = vmax.xlane.f32.xlu0 %v292
        %v322 = vpop.xlane.xlu0 %321
        %323 = vmax.xlane.f32.xlu0 %v293
        %v324 = vpop.xlane.xlu0 %323
        %325 = vmax.xlane.f32.xlu0 %v294
        %v326 = vpop.xlane.xlu0 %325
        %vm327 = vcmask 7168
        %328 = vst.msk [vmem:[#allocation2] sm:$0xff] %vm327, %v296
        %329 = vst.msk [vmem:[#allocation2 + $0x8] sm:$0xff] %vm327, %v298
        %330 = vst.msk [vmem:[#allocation2 + $0x10] sm:$0xff] %vm327, %v300
        %331 = vst.msk [vmem:[#allocation2 + $0x18] sm:$0xff] %vm327, %v302
        %332 = vst.msk [vmem:[#allocation2 + $0x20] sm:$0xff] %vm327, %v304
        %333 = vst.msk [vmem:[#allocation2 + $0x28] sm:$0xff] %vm327, %v306
        %334 = vst.msk [vmem:[#allocation2 + $0x30] sm:$0xff] %vm327, %v308
        %335 = vst.msk [vmem:[#allocation2 + $0x38] sm:$0xff] %vm327, %v310
        %336 = vst.msk [vmem:[#allocation2 + $0x40] sm:$0xff] %vm327, %v312
        %337 = vst.msk [vmem:[#allocation2 + $0x48] sm:$0xff] %vm327, %v314
        %338 = vst.msk [vmem:[#allocation2 + $0x50] sm:$0xff] %vm327, %v316
        %339 = vst.msk [vmem:[#allocation2 + $0x58] sm:$0xff] %vm327, %v318
        %340 = vst.msk [vmem:[#allocation2 + $0x60] sm:$0xff] %vm327, %v320
        %341 = vst.msk [vmem:[#allocation2 + $0x68] sm:$0xff] %vm327, %v322
        %342 = vst.msk [vmem:[#allocation2 + $0x70] sm:$0xff] %vm327, %v324
        %343 = vst.msk [vmem:[#allocation2 + $0x78] sm:$0xff] %vm327, %v326
        %344 = vadd.xlane.f32.xlu0 %v279
        %v345 = vpop.xlane.xlu0 %344
        %346 = vadd.xlane.f32.xlu0 %v280
        %v347 = vpop.xlane.xlu0 %346
        %348 = vadd.xlane.f32.xlu0 %v281
        %v349 = vpop.xlane.xlu0 %348
        %350 = vadd.xlane.f32.xlu0 %v282
        %v351 = vpop.xlane.xlu0 %350
        %352 = vadd.xlane.f32.xlu0 %v283
        %v353 = vpop.xlane.xlu0 %352
        %354 = vadd.xlane.f32.xlu0 %v284
        %v355 = vpop.xlane.xlu0 %354
        %356 = vadd.xlane.f32.xlu0 %v285
        %v357 = vpop.xlane.xlu0 %356
        %358 = vadd.xlane.f32.xlu0 %v286
        %v359 = vpop.xlane.xlu0 %358
        %360 = vadd.xlane.f32.xlu0 %v287
        %v361 = vpop.xlane.xlu0 %360
        %362 = vadd.xlane.f32.xlu0 %v288
        %v363 = vpop.xlane.xlu0 %362
        %364 = vadd.xlane.f32.xlu0 %v289
        %v365 = vpop.xlane.xlu0 %364
        %366 = vadd.xlane.f32.xlu0 %v290
        %v367 = vpop.xlane.xlu0 %366
        %368 = vadd.xlane.f32.xlu0 %v291
        %v369 = vpop.xlane.xlu0 %368
        %370 = vadd.xlane.f32.xlu0 %v292
        %v371 = vpop.xlane.xlu0 %370
        %372 = vadd.xlane.f32.xlu0 %v293
        %v373 = vpop.xlane.xlu0 %372
        %374 = vadd.xlane.f32.xlu0 %v294
        %v375 = vpop.xlane.xlu0 %374
        %v376 = vmul.f32 %v345, 0.0078125
        %v377 = vmul.f32 %v347, 0.0078125
        %v378 = vmul.f32 %v349, 0.0078125
        %v379 = vmul.f32 %v351, 0.0078125
        %v380 = vmul.f32 %v353, 0.0078125
        %v381 = vmul.f32 %v355, 0.0078125
        %v382 = vmul.f32 %v357, 0.0078125
        %v383 = vmul.f32 %v359, 0.0078125
        %v384 = vmul.f32 %v361, 0.0078125
        %v385 = vmul.f32 %v363, 0.0078125
        %v386 = vmul.f32 %v365, 0.0078125
        %v387 = vmul.f32 %v367, 0.0078125
        %v388 = vmul.f32 %v369, 0.0078125
        %v389 = vmul.f32 %v371, 0.0078125
        %v390 = vmul.f32 %v373, 0.0078125
        %v391 = vmul.f32 %v375, 0.0078125
        %vm392 = vcmask 39968
        %393 = vst.msk [vmem:[#allocation2] sm:$0xff] %vm392, %v376
        %394 = vst.msk [vmem:[#allocation2 + $0x8] sm:$0xff] %vm392, %v377
        %395 = vst.msk [vmem:[#allocation2 + $0x10] sm:$0xff] %vm392, %v378
        %396 = vst.msk [vmem:[#allocation2 + $0x18] sm:$0xff] %vm392, %v379
        %397 = vst.msk [vmem:[#allocation2 + $0x20] sm:$0xff] %vm392, %v380
        %398 = vst.msk [vmem:[#allocation2 + $0x28] sm:$0xff] %vm392, %v381
        %399 = vst.msk [vmem:[#allocation2 + $0x30] sm:$0xff] %vm392, %v382
        %400 = vst.msk [vmem:[#allocation2 + $0x38] sm:$0xff] %vm392, %v383
        %401 = vst.msk [vmem:[#allocation2 + $0x40] sm:$0xff] %vm392, %v384
        %402 = vst.msk [vmem:[#allocation2 + $0x48] sm:$0xff] %vm392, %v385
        %403 = vst.msk [vmem:[#allocation2 + $0x50] sm:$0xff] %vm392, %v386
        %404 = vst.msk [vmem:[#allocation2 + $0x58] sm:$0xff] %vm392, %v387
        %405 = vst.msk [vmem:[#allocation2 + $0x60] sm:$0xff] %vm392, %v388
        %406 = vst.msk [vmem:[#allocation2 + $0x68] sm:$0xff] %vm392, %v389
        %407 = vst.msk [vmem:[#allocation2 + $0x70] sm:$0xff] %vm392, %v390
        %408 = vst.msk [vmem:[#allocation2 + $0x78] sm:$0xff] %vm392, %v391
        %s409 = scalar_lea.vmem %s238, 128 [#allocation3]
        %v410 = vld [vmem:[%s409] sm:$0xff]
        %v411 = vld [vmem:[%s409 + $0x8] sm:$0xff]
        %v412 = vld [vmem:[%s409 + $0x10] sm:$0xff]
        %v413 = vld [vmem:[%s409 + $0x18] sm:$0xff]
        %v414 = vld [vmem:[%s409 + $0x20] sm:$0xff]
        %v415 = vld [vmem:[%s409 + $0x28] sm:$0xff]
        %v416 = vld [vmem:[%s409 + $0x30] sm:$0xff]
        %v417 = vld [vmem:[%s409 + $0x38] sm:$0xff]
        %v418 = vld [vmem:[%s409 + $0x40] sm:$0xff]
        %v419 = vld [vmem:[%s409 + $0x48] sm:$0xff]
        %v420 = vld [vmem:[%s409 + $0x50] sm:$0xff]
        %v421 = vld [vmem:[%s409 + $0x58] sm:$0xff]
        %v422 = vld [vmem:[%s409 + $0x60] sm:$0xff]
        %v423 = vld [vmem:[%s409 + $0x68] sm:$0xff]
        %v424 = vld [vmem:[%s409 + $0x70] sm:$0xff]
        %v425 = vld [vmem:[%s409 + $0x78] sm:$0xff]
        %426 = vmax.xlane.f32.xlu0 %v410
        %v427 = vpop.xlane.xlu0 %426
        %428 = vmax.xlane.f32.xlu0 %v411
        %v429 = vpop.xlane.xlu0 %428
        %430 = vmax.xlane.f32.xlu0 %v412
        %v431 = vpop.xlane.xlu0 %430
        %432 = vmax.xlane.f32.xlu0 %v413
        %v433 = vpop.xlane.xlu0 %432
        %434 = vmax.xlane.f32.xlu0 %v414
        %v435 = vpop.xlane.xlu0 %434
        %436 = vmax.xlane.f32.xlu0 %v415
        %v437 = vpop.xlane.xlu0 %436
        %438 = vmax.xlane.f32.xlu0 %v416
        %v439 = vpop.xlane.xlu0 %438
        %440 = vmax.xlane.f32.xlu0 %v417
        %v441 = vpop.xlane.xlu0 %440
        %442 = vmax.xlane.f32.xlu0 %v418
        %v443 = vpop.xlane.xlu0 %442
        %444 = vmax.xlane.f32.xlu0 %v419
        %v445 = vpop.xlane.xlu0 %444
        %446 = vmax.xlane.f32.xlu0 %v420
        %v447 = vpop.xlane.xlu0 %446
        %448 = vmax.xlane.f32.xlu0 %v421
        %v449 = vpop.xlane.xlu0 %448
        %450 = vmax.xlane.f32.xlu0 %v422
        %v451 = vpop.xlane.xlu0 %450
        %452 = vmax.xlane.f32.xlu0 %v423
        %v453 = vpop.xlane.xlu0 %452
        %454 = vmax.xlane.f32.xlu0 %v424
        %v455 = vpop.xlane.xlu0 %454
        %456 = vmax.xlane.f32.xlu0 %v425
        %v457 = vpop.xlane.xlu0 %456
        %vm458 = vcmask 15368
        %459 = vst.msk [vmem:[#allocation2] sm:$0xff] %vm458, %v427
        %460 = vst.msk [vmem:[#allocation2 + $0x8] sm:$0xff] %vm458, %v429
        %461 = vst.msk [vmem:[#allocation2 + $0x10] sm:$0xff] %vm458, %v431
        %462 = vst.msk [vmem:[#allocation2 + $0x18] sm:$0xff] %vm458, %v433
        %463 = vst.msk [vmem:[#allocation2 + $0x20] sm:$0xff] %vm458, %v435
        %464 = vst.msk [vmem:[#allocation2 + $0x28] sm:$0xff] %vm458, %v437
        %465 = vst.msk [vmem:[#allocation2 + $0x30] sm:$0xff] %vm458, %v439
        %466 = vst.msk [vmem:[#allocation2 + $0x38] sm:$0xff] %vm458, %v441
        %467 = vst.msk [vmem:[#allocation2 + $0x40] sm:$0xff] %vm458, %v443
        %468 = vst.msk [vmem:[#allocation2 + $0x48] sm:$0xff] %vm458, %v445
        %469 = vst.msk [vmem:[#allocation2 + $0x50] sm:$0xff] %vm458, %v447
        %470 = vst.msk [vmem:[#allocation2 + $0x58] sm:$0xff] %vm458, %v449
        %471 = vst.msk [vmem:[#allocation2 + $0x60] sm:$0xff] %vm458, %v451
        %472 = vst.msk [vmem:[#allocation2 + $0x68] sm:$0xff] %vm458, %v453
        %473 = vst.msk [vmem:[#allocation2 + $0x70] sm:$0xff] %vm458, %v455
        %474 = vst.msk [vmem:[#allocation2 + $0x78] sm:$0xff] %vm458, %v457
        %475 = vadd.xlane.f32.xlu0 %v410
        %v476 = vpop.xlane.xlu0 %475
        %477 = vadd.xlane.f32.xlu0 %v411
        %v478 = vpop.xlane.xlu0 %477
        %479 = vadd.xlane.f32.xlu0 %v412
        %v480 = vpop.xlane.xlu0 %479
        %481 = vadd.xlane.f32.xlu0 %v413
        %v482 = vpop.xlane.xlu0 %481
        %483 = vadd.xlane.f32.xlu0 %v414
        %v484 = vpop.xlane.xlu0 %483
        %485 = vadd.xlane.f32.xlu0 %v415
        %v486 = vpop.xlane.xlu0 %485
        %487 = vadd.xlane.f32.xlu0 %v416
        %v488 = vpop.xlane.xlu0 %487
        %489 = vadd.xlane.f32.xlu0 %v417
        %v490 = vpop.xlane.xlu0 %489
        %491 = vadd.xlane.f32.xlu0 %v418
        %v492 = vpop.xlane.xlu0 %491
        %493 = vadd.xlane.f32.xlu0 %v419
        %v494 = vpop.xlane.xlu0 %493
        %495 = vadd.xlane.f32.xlu0 %v420
        %v496 = vpop.xlane.xlu0 %495
        %497 = vadd.xlane.f32.xlu0 %v421
        %v498 = vpop.xlane.xlu0 %497
        %499 = vadd.xlane.f32.xlu0 %v422
        %v500 = vpop.xlane.xlu0 %499
        %501 = vadd.xlane.f32.xlu0 %v423
        %v502 = vpop.xlane.xlu0 %501
        %503 = vadd.xlane.f32.xlu0 %v424
        %v504 = vpop.xlane.xlu0 %503
        %505 = vadd.xlane.f32.xlu0 %v425
        %v506 = vpop.xlane.xlu0 %505
        %v507 = vmul.f32 %v476, 0.0078125
        %v508 = vmul.f32 %v478, 0.0078125
        %v509 = vmul.f32 %v480, 0.0078125
        %v510 = vmul.f32 %v482, 0.0078125
        %v511 = vmul.f32 %v484, 0.0078125
        %v512 = vmul.f32 %v486, 0.0078125
        %v513 = vmul.f32 %v488, 0.0078125
        %v514 = vmul.f32 %v490, 0.0078125
        %v515 = vmul.f32 %v492, 0.0078125
        %v516 = vmul.f32 %v494, 0.0078125
        %v517 = vmul.f32 %v496, 0.0078125
        %v518 = vmul.f32 %v498, 0.0078125
        %v519 = vmul.f32 %v500, 0.0078125
        %v520 = vmul.f32 %v502, 0.0078125
        %v521 = vmul.f32 %v504, 0.0078125
        %v522 = vmul.f32 %v506, 0.0078125
        %vm523 = vcmask 48168
        %524 = vst.msk [vmem:[#allocation2] sm:$0xff] %vm523, %v507
        %525 = vst.msk [vmem:[#allocation2 + $0x8] sm:$0xff] %vm523, %v508
        %526 = vst.msk [vmem:[#allocation2 + $0x10] sm:$0xff] %vm523, %v509
        %527 = vst.msk [vmem:[#allocation2 + $0x18] sm:$0xff] %vm523, %v510
        %528 = vst.msk [vmem:[#allocation2 + $0x20] sm:$0xff] %vm523, %v511
        %529 = vst.msk [vmem:[#allocation2 + $0x28] sm:$0xff] %vm523, %v512
        %530 = vst.msk [vmem:[#allocation2 + $0x30] sm:$0xff] %vm523, %v513
        %531 = vst.msk [vmem:[#allocation2 + $0x38] sm:$0xff] %vm523, %v514
        %532 = vst.msk [vmem:[#allocation2 + $0x40] sm:$0xff] %vm523, %v515
        %533 = vst.msk [vmem:[#allocation2 + $0x48] sm:$0xff] %vm523, %v516
        %534 = vst.msk [vmem:[#allocation2 + $0x50] sm:$0xff] %vm523, %v517
        %535 = vst.msk [vmem:[#allocation2 + $0x58] sm:$0xff] %vm523, %v518
        %536 = vst.msk [vmem:[#allocation2 + $0x60] sm:$0xff] %vm523, %v519
        %537 = vst.msk [vmem:[#allocation2 + $0x68] sm:$0xff] %vm523, %v520
        %538 = vst.msk [vmem:[#allocation2 + $0x70] sm:$0xff] %vm523, %v521
        %539 = vst.msk [vmem:[#allocation2 + $0x78] sm:$0xff] %vm523, %v522
        %s540 = scalar_lea.vmem %s238, 256 [#allocation3]
        %v541 = vld [vmem:[%s540] sm:$0xff]
        %v542 = vld [vmem:[%s540 + $0x8] sm:$0xff]
        %v543 = vld [vmem:[%s540 + $0x10] sm:$0xff]
        %v544 = vld [vmem:[%s540 + $0x18] sm:$0xff]
        %v545 = vld [vmem:[%s540 + $0x20] sm:$0xff]
        %v546 = vld [vmem:[%s540 + $0x28] sm:$0xff]
        %v547 = vld [vmem:[%s540 + $0x30] sm:$0xff]
        %v548 = vld [vmem:[%s540 + $0x38] sm:$0xff]
        %v549 = vld [vmem:[%s540 + $0x40] sm:$0xff]
        %v550 = vld [vmem:[%s540 + $0x48] sm:$0xff]
        %v551 = vld [vmem:[%s540 + $0x50] sm:$0xff]
        %v552 = vld [vmem:[%s540 + $0x58] sm:$0xff]
        %v553 = vld [vmem:[%s540 + $0x60] sm:$0xff]
        %v554 = vld [vmem:[%s540 + $0x68] sm:$0xff]
        %v555 = vld [vmem:[%s540 + $0x70] sm:$0xff]
        %v556 = vld [vmem:[%s540 + $0x78] sm:$0xff]
        %557 = vmax.xlane.f32.xlu0 %v541
        %v558 = vpop.xlane.xlu0 %557
        %559 = vmax.xlane.f32.xlu0 %v542
        %v560 = vpop.xlane.xlu0 %559
        %561 = vmax.xlane.f32.xlu0 %v543
        %v562 = vpop.xlane.xlu0 %561
        %563 = vmax.xlane.f32.xlu0 %v544
        %v564 = vpop.xlane.xlu0 %563
        %565 = vmax.xlane.f32.xlu0 %v545
        %v566 = vpop.xlane.xlu0 %565
        %567 = vmax.xlane.f32.xlu0 %v546
        %v568 = vpop.xlane.xlu0 %567
        %569 = vmax.xlane.f32.xlu0 %v547
        %v570 = vpop.xlane.xlu0 %569
        %571 = vmax.xlane.f32.xlu0 %v548
        %v572 = vpop.xlane.xlu0 %571
        %573 = vmax.xlane.f32.xlu0 %v549
        %v574 = vpop.xlane.xlu0 %573
        %575 = vmax.xlane.f32.xlu0 %v550
        %v576 = vpop.xlane.xlu0 %575
        %577 = vmax.xlane.f32.xlu0 %v551
        %v578 = vpop.xlane.xlu0 %577
        %579 = vmax.xlane.f32.xlu0 %v552
        %v580 = vpop.xlane.xlu0 %579
        %581 = vmax.xlane.f32.xlu0 %v553
        %v582 = vpop.xlane.xlu0 %581
        %583 = vmax.xlane.f32.xlu0 %v554
        %v584 = vpop.xlane.xlu0 %583
        %585 = vmax.xlane.f32.xlu0 %v555
        %v586 = vpop.xlane.xlu0 %585
        %587 = vmax.xlane.f32.xlu0 %v556
        %v588 = vpop.xlane.xlu0 %587
        %vm589 = vcmask 23568
        %590 = vst.msk [vmem:[#allocation2] sm:$0xff] %vm589, %v558
        %591 = vst.msk [vmem:[#allocation2 + $0x8] sm:$0xff] %vm589, %v560
        %592 = vst.msk [vmem:[#allocation2 + $0x10] sm:$0xff] %vm589, %v562
        %593 = vst.msk [vmem:[#allocation2 + $0x18] sm:$0xff] %vm589, %v564
        %594 = vst.msk [vmem:[#allocation2 + $0x20] sm:$0xff] %vm589, %v566
        %595 = vst.msk [vmem:[#allocation2 + $0x28] sm:$0xff] %vm589, %v568
        %596 = vst.msk [vmem:[#allocation2 + $0x30] sm:$0xff] %vm589, %v570
        %597 = vst.msk [vmem:[#allocation2 + $0x38] sm:$0xff] %vm589, %v572
        %598 = vst.msk [vmem:[#allocation2 + $0x40] sm:$0xff] %vm589, %v574
        %599 = vst.msk [vmem:[#allocation2 + $0x48] sm:$0xff] %vm589, %v576
        %600 = vst.msk [vmem:[#allocation2 + $0x50] sm:$0xff] %vm589, %v578
        %601 = vst.msk [vmem:[#allocation2 + $0x58] sm:$0xff] %vm589, %v580
        %602 = vst.msk [vmem:[#allocation2 + $0x60] sm:$0xff] %vm589, %v582
        %603 = vst.msk [vmem:[#allocation2 + $0x68] sm:$0xff] %vm589, %v584
        %604 = vst.msk [vmem:[#allocation2 + $0x70] sm:$0xff] %vm589, %v586
        %605 = vst.msk [vmem:[#allocation2 + $0x78] sm:$0xff] %vm589, %v588
        %606 = vadd.xlane.f32.xlu0 %v541
        %v607 = vpop.xlane.xlu0 %606
        %608 = vadd.xlane.f32.xlu0 %v542
        %v609 = vpop.xlane.xlu0 %608
        %610 = vadd.xlane.f32.xlu0 %v543
        %v611 = vpop.xlane.xlu0 %610
        %612 = vadd.xlane.f32.xlu0 %v544
        %v613 = vpop.xlane.xlu0 %612
        %614 = vadd.xlane.f32.xlu0 %v545
        %v615 = vpop.xlane.xlu0 %614
        %616 = vadd.xlane.f32.xlu0 %v546
        %v617 = vpop.xlane.xlu0 %616
        %618 = vadd.xlane.f32.xlu0 %v547
        %v619 = vpop.xlane.xlu0 %618
        %620 = vadd.xlane.f32.xlu0 %v548
        %v621 = vpop.xlane.xlu0 %620
        %622 = vadd.xlane.f32.xlu0 %v549
        %v623 = vpop.xlane.xlu0 %622
        %624 = vadd.xlane.f32.xlu0 %v550
        %v625 = vpop.xlane.xlu0 %624
        %626 = vadd.xlane.f32.xlu0 %v551
        %v627 = vpop.xlane.xlu0 %626
        %628 = vadd.xlane.f32.xlu0 %v552
        %v629 = vpop.xlane.xlu0 %628
        %630 = vadd.xlane.f32.xlu0 %v553
        %v631 = vpop.xlane.xlu0 %630
        %632 = vadd.xlane.f32.xlu0 %v554
        %v633 = vpop.xlane.xlu0 %632
        %634 = vadd.xlane.f32.xlu0 %v555
        %v635 = vpop.xlane.xlu0 %634
        %636 = vadd.xlane.f32.xlu0 %v556
        %v637 = vpop.xlane.xlu0 %636
        %v638 = vmul.f32 %v607, 0.0078125
        %v639 = vmul.f32 %v609, 0.0078125
        %v640 = vmul.f32 %v611, 0.0078125
        %v641 = vmul.f32 %v613, 0.0078125
        %v642 = vmul.f32 %v615, 0.0078125
        %v643 = vmul.f32 %v617, 0.0078125
        %v644 = vmul.f32 %v619, 0.0078125
        %v645 = vmul.f32 %v621, 0.0078125
        %v646 = vmul.f32 %v623, 0.0078125
        %v647 = vmul.f32 %v625, 0.0078125
        %v648 = vmul.f32 %v627, 0.0078125
        %v649 = vmul.f32 %v629, 0.0078125
        %v650 = vmul.f32 %v631, 0.0078125
        %v651 = vmul.f32 %v633, 0.0078125
        %v652 = vmul.f32 %v635, 0.0078125
        %v653 = vmul.f32 %v637, 0.0078125
        %vm654 = vcmask 56368
        %655 = vst.msk [vmem:[#allocation2] sm:$0xff] %vm654, %v638
        %656 = vst.msk [vmem:[#allocation2 + $0x8] sm:$0xff] %vm654, %v639
        %657 = vst.msk [vmem:[#allocation2 + $0x10] sm:$0xff] %vm654, %v640
        %658 = vst.msk [vmem:[#allocation2 + $0x18] sm:$0xff] %vm654, %v641
        %659 = vst.msk [vmem:[#allocation2 + $0x20] sm:$0xff] %vm654, %v642
        %660 = vst.msk [vmem:[#allocation2 + $0x28] sm:$0xff] %vm654, %v643
        %661 = vst.msk [vmem:[#allocation2 + $0x30] sm:$0xff] %vm654, %v644
        %662 = vst.msk [vmem:[#allocation2 + $0x38] sm:$0xff] %vm654, %v645
        %663 = vst.msk [vmem:[#allocation2 + $0x40] sm:$0xff] %vm654, %v646
        %664 = vst.msk [vmem:[#allocation2 + $0x48] sm:$0xff] %vm654, %v647
        %665 = vst.msk [vmem:[#allocation2 + $0x50] sm:$0xff] %vm654, %v648
        %666 = vst.msk [vmem:[#allocation2 + $0x58] sm:$0xff] %vm654, %v649
        %667 = vst.msk [vmem:[#allocation2 + $0x60] sm:$0xff] %vm654, %v650
        %668 = vst.msk [vmem:[#allocation2 + $0x68] sm:$0xff] %vm654, %v651
        %669 = vst.msk [vmem:[#allocation2 + $0x70] sm:$0xff] %vm654, %v652
        %670 = vst.msk [vmem:[#allocation2 + $0x78] sm:$0xff] %vm654, %v653
        %s671 = scalar_lea.vmem %s238, 384 [#allocation3]
        %v672 = vld [vmem:[%s671] sm:$0xff]
        %v673 = vld [vmem:[%s671 + $0x8] sm:$0xff]
        %v674 = vld [vmem:[%s671 + $0x10] sm:$0xff]
        %v675 = vld [vmem:[%s671 + $0x18] sm:$0xff]
        %v676 = vld [vmem:[%s671 + $0x20] sm:$0xff]
        %v677 = vld [vmem:[%s671 + $0x28] sm:$0xff]
        %v678 = vld [vmem:[%s671 + $0x30] sm:$0xff]
        %v679 = vld [vmem:[%s671 + $0x38] sm:$0xff]
        %v680 = vld [vmem:[%s671 + $0x40] sm:$0xff]
        %v681 = vld [vmem:[%s671 + $0x48] sm:$0xff]
        %v682 = vld [vmem:[%s671 + $0x50] sm:$0xff]
        %v683 = vld [vmem:[%s671 + $0x58] sm:$0xff]
        %v684 = vld [vmem:[%s671 + $0x60] sm:$0xff]
        %v685 = vld [vmem:[%s671 + $0x68] sm:$0xff]
        %v686 = vld [vmem:[%s671 + $0x70] sm:$0xff]
        %v687 = vld [vmem:[%s671 + $0x78] sm:$0xff]
        %688 = vmax.xlane.f32.xlu0 %v672
        %v689 = vpop.xlane.xlu0 %688
        %690 = vmax.xlane.f32.xlu0 %v673
        %v691 = vpop.xlane.xlu0 %690
        %692 = vmax.xlane.f32.xlu0 %v674
        %v693 = vpop.xlane.xlu0 %692
        %694 = vmax.xlane.f32.xlu0 %v675
        %v695 = vpop.xlane.xlu0 %694
        %696 = vmax.xlane.f32.xlu0 %v676
        %v697 = vpop.xlane.xlu0 %696
        %698 = vmax.xlane.f32.xlu0 %v677
        %v699 = vpop.xlane.xlu0 %698
        %700 = vmax.xlane.f32.xlu0 %v678
        %v701 = vpop.xlane.xlu0 %700
        %702 = vmax.xlane.f32.xlu0 %v679
        %v703 = vpop.xlane.xlu0 %702
        %704 = vmax.xlane.f32.xlu0 %v680
        %v705 = vpop.xlane.xlu0 %704
        %706 = vmax.xlane.f32.xlu0 %v681
        %v707 = vpop.xlane.xlu0 %706
        %708 = vmax.xlane.f32.xlu0 %v682
        %v709 = vpop.xlane.xlu0 %708
        %710 = vmax.xlane.f32.xlu0 %v683
        %v711 = vpop.xlane.xlu0 %710
        %712 = vmax.xlane.f32.xlu0 %v684
        %v713 = vpop.xlane.xlu0 %712
        %714 = vmax.xlane.f32.xlu0 %v685
        %v715 = vpop.xlane.xlu0 %714
        %716 = vmax.xlane.f32.xlu0 %v686
        %v717 = vpop.xlane.xlu0 %716
        %718 = vmax.xlane.f32.xlu0 %v687
        %v719 = vpop.xlane.xlu0 %718
        %vm720 = vcmask 31768
        %721 = vst.msk [vmem:[#allocation2] sm:$0xff] %vm720, %v689
        %722 = vst.msk [vmem:[#allocation2 + $0x8] sm:$0xff] %vm720, %v691
        %723 = vst.msk [vmem:[#allocation2 + $0x10] sm:$0xff] %vm720, %v693
        %724 = vst.msk [vmem:[#allocation2 + $0x18] sm:$0xff] %vm720, %v695
        %725 = vst.msk [vmem:[#allocation2 + $0x20] sm:$0xff] %vm720, %v697
        %726 = vst.msk [vmem:[#allocation2 + $0x28] sm:$0xff] %vm720, %v699
        %727 = vst.msk [vmem:[#allocation2 + $0x30] sm:$0xff] %vm720, %v701
        %728 = vst.msk [vmem:[#allocation2 + $0x38] sm:$0xff] %vm720, %v703
        %729 = vst.msk [vmem:[#allocation2 + $0x40] sm:$0xff] %vm720, %v705
        %730 = vst.msk [vmem:[#allocation2 + $0x48] sm:$0xff] %vm720, %v707
        %731 = vst.msk [vmem:[#allocation2 + $0x50] sm:$0xff] %vm720, %v709
        %732 = vst.msk [vmem:[#allocation2 + $0x58] sm:$0xff] %vm720, %v711
        %733 = vst.msk [vmem:[#allocation2 + $0x60] sm:$0xff] %vm720, %v713
        %734 = vst.msk [vmem:[#allocation2 + $0x68] sm:$0xff] %vm720, %v715
        %735 = vst.msk [vmem:[#allocation2 + $0x70] sm:$0xff] %vm720, %v717
        %736 = vst.msk [vmem:[#allocation2 + $0x78] sm:$0xff] %vm720, %v719
        %737 = vadd.xlane.f32.xlu0 %v672
        %v738 = vpop.xlane.xlu0 %737
        %739 = vadd.xlane.f32.xlu0 %v673
        %v740 = vpop.xlane.xlu0 %739
        %741 = vadd.xlane.f32.xlu0 %v674
        %v742 = vpop.xlane.xlu0 %741
        %743 = vadd.xlane.f32.xlu0 %v675
        %v744 = vpop.xlane.xlu0 %743
        %745 = vadd.xlane.f32.xlu0 %v676
        %v746 = vpop.xlane.xlu0 %745
        %747 = vadd.xlane.f32.xlu0 %v677
        %v748 = vpop.xlane.xlu0 %747
        %749 = vadd.xlane.f32.xlu0 %v678
        %v750 = vpop.xlane.xlu0 %749
        %751 = vadd.xlane.f32.xlu0 %v679
        %v752 = vpop.xlane.xlu0 %751
        %753 = vadd.xlane.f32.xlu0 %v680
        %v754 = vpop.xlane.xlu0 %753
        %755 = vadd.xlane.f32.xlu0 %v681
        %v756 = vpop.xlane.xlu0 %755
        %757 = vadd.xlane.f32.xlu0 %v682
        %v758 = vpop.xlane.xlu0 %757
        %759 = vadd.xlane.f32.xlu0 %v683
        %v760 = vpop.xlane.xlu0 %759
        %761 = vadd.xlane.f32.xlu0 %v684
        %v762 = vpop.xlane.xlu0 %761
        %763 = vadd.xlane.f32.xlu0 %v685
        %v764 = vpop.xlane.xlu0 %763
        %765 = vadd.xlane.f32.xlu0 %v686
        %v766 = vpop.xlane.xlu0 %765
        %767 = vadd.xlane.f32.xlu0 %v687
        %v768 = vpop.xlane.xlu0 %767
        %v769 = vmul.f32 %v738, 0.0078125
        %v770 = vmul.f32 %v740, 0.0078125
        %v771 = vmul.f32 %v742, 0.0078125
        %v772 = vmul.f32 %v744, 0.0078125
        %v773 = vmul.f32 %v746, 0.0078125
        %v774 = vmul.f32 %v748, 0.0078125
        %v775 = vmul.f32 %v750, 0.0078125
        %v776 = vmul.f32 %v752, 0.0078125
        %v777 = vmul.f32 %v754, 0.0078125
        %v778 = vmul.f32 %v756, 0.0078125
        %v779 = vmul.f32 %v758, 0.0078125
        %v780 = vmul.f32 %v760, 0.0078125
        %v781 = vmul.f32 %v762, 0.0078125
        %v782 = vmul.f32 %v764, 0.0078125
        %v783 = vmul.f32 %v766, 0.0078125
        %v784 = vmul.f32 %v768, 0.0078125
        %vm785 = vcmask 64568
        %786 = vst.msk [vmem:[#allocation2] sm:$0xff] %vm785, %v769
        %787 = vst.msk [vmem:[#allocation2 + $0x8] sm:$0xff] %vm785, %v770
        %788 = vst.msk [vmem:[#allocation2 + $0x10] sm:$0xff] %vm785, %v771
        %789 = vst.msk [vmem:[#allocation2 + $0x18] sm:$0xff] %vm785, %v772
        %790 = vst.msk [vmem:[#allocation2 + $0x20] sm:$0xff] %vm785, %v773
        %791 = vst.msk [vmem:[#allocation2 + $0x28] sm:$0xff] %vm785, %v774
        %792 = vst.msk [vmem:[#allocation2 + $0x30] sm:$0xff] %vm785, %v775
        %793 = vst.msk [vmem:[#allocation2 + $0x38] sm:$0xff] %vm785, %v776
        %794 = vst.msk [vmem:[#allocation2 + $0x40] sm:$0xff] %vm785, %v777
        %795 = vst.msk [vmem:[#allocation2 + $0x48] sm:$0xff] %vm785, %v778
        %796 = vst.msk [vmem:[#allocation2 + $0x50] sm:$0xff] %vm785, %v779
        %797 = vst.msk [vmem:[#allocation2 + $0x58] sm:$0xff] %vm785, %v780
        %798 = vst.msk [vmem:[#allocation2 + $0x60] sm:$0xff] %vm785, %v781
        %799 = vst.msk [vmem:[#allocation2 + $0x68] sm:$0xff] %vm785, %v782
        %800 = vst.msk [vmem:[#allocation2 + $0x70] sm:$0xff] %vm785, %v783
        %801 = vst.msk [vmem:[#allocation2 + $0x78] sm:$0xff] %vm785, %v784
        %v802 = vld [vmem:[%s3] sm:$0xff]
        %v803 = vld [vmem:[%s3 + $0x8] sm:$0xff]
        %v804 = vld [vmem:[%s3 + $0x10] sm:$0xff]
        %v805 = vld [vmem:[%s3 + $0x18] sm:$0xff]
        %v806 = vld [vmem:[%s3 + $0x20] sm:$0xff]
        %v807 = vld [vmem:[%s3 + $0x28] sm:$0xff]
        %v808 = vld [vmem:[%s3 + $0x30] sm:$0xff]
        %v809 = vld [vmem:[%s3 + $0x38] sm:$0xff]
        %v810 = vld [vmem:[%s3 + $0x40] sm:$0xff]
        %v811 = vld [vmem:[%s3 + $0x48] sm:$0xff]
        %v812 = vld [vmem:[%s3 + $0x50] sm:$0xff]
        %v813 = vld [vmem:[%s3 + $0x58] sm:$0xff]
        %v814 = vld [vmem:[%s3 + $0x60] sm:$0xff]
        %v815 = vld [vmem:[%s3 + $0x68] sm:$0xff]
        %v816 = vld [vmem:[%s3 + $0x70] sm:$0xff]
        %v817 = vld [vmem:[%s3 + $0x78] sm:$0xff]
        %v818 = vld [vmem:[%s1] sm:$0xff]
        %v819 = vld [vmem:[%s1 + $0x8] sm:$0xff]
        %v820 = vld [vmem:[%s1 + $0x10] sm:$0xff]
        %v821 = vld [vmem:[%s1 + $0x18] sm:$0xff]
        %v822 = vld [vmem:[%s1 + $0x20] sm:$0xff]
        %v823 = vld [vmem:[%s1 + $0x28] sm:$0xff]
        %v824 = vld [vmem:[%s1 + $0x30] sm:$0xff]
        %v825 = vld [vmem:[%s1 + $0x38] sm:$0xff]
        %v826 = vld [vmem:[%s1 + $0x40] sm:$0xff]
        %v827 = vld [vmem:[%s1 + $0x48] sm:$0xff]
        %v828 = vld [vmem:[%s1 + $0x50] sm:$0xff]
        %v829 = vld [vmem:[%s1 + $0x58] sm:$0xff]
        %v830 = vld [vmem:[%s1 + $0x60] sm:$0xff]
        %v831 = vld [vmem:[%s1 + $0x68] sm:$0xff]
        %v832 = vld [vmem:[%s1 + $0x70] sm:$0xff]
        %v833 = vld [vmem:[%s1 + $0x78] sm:$0xff]
        %v834 = vld [vmem:[#allocation2] sm:$0xff]
        %v835 = vld [vmem:[#allocation2 + $0x8] sm:$0xff]
        %v836 = vld [vmem:[#allocation2 + $0x10] sm:$0xff]
        %v837 = vld [vmem:[#allocation2 + $0x18] sm:$0xff]
        %v838 = vld [vmem:[#allocation2 + $0x20] sm:$0xff]
        %v839 = vld [vmem:[#allocation2 + $0x28] sm:$0xff]
        %v840 = vld [vmem:[#allocation2 + $0x30] sm:$0xff]
        %v841 = vld [vmem:[#allocation2 + $0x38] sm:$0xff]
        %v842 = vld [vmem:[#allocation2 + $0x40] sm:$0xff]
        %v843 = vld [vmem:[#allocation2 + $0x48] sm:$0xff]
        %v844 = vld [vmem:[#allocation2 + $0x50] sm:$0xff]
        %v845 = vld [vmem:[#allocation2 + $0x58] sm:$0xff]
        %v846 = vld [vmem:[#allocation2 + $0x60] sm:$0xff]
        %v847 = vld [vmem:[#allocation2 + $0x68] sm:$0xff]
        %v848 = vld [vmem:[#allocation2 + $0x70] sm:$0xff]
        %v849 = vld [vmem:[#allocation2 + $0x78] sm:$0xff]
        %851 = vset.pattern.permute.xlu0 0
        %852 = vperm.xlu0 %851, %v802
        %v853 = vpop.permute.xlu0 %852
        %856 = vset.pattern.permute.xlu0 0
        %857 = vperm.xlu0 %856, %v803
        %v858 = vpop.permute.xlu0 %857
        %861 = vset.pattern.permute.xlu0 0
        %862 = vperm.xlu0 %861, %v804
        %v863 = vpop.permute.xlu0 %862
        %866 = vset.pattern.permute.xlu0 0
        %867 = vperm.xlu0 %866, %v805
        %v868 = vpop.permute.xlu0 %867
        %871 = vset.pattern.permute.xlu0 0
        %872 = vperm.xlu0 %871, %v806
        %v873 = vpop.permute.xlu0 %872
        %876 = vset.pattern.permute.xlu0 0
        %877 = vperm.xlu0 %876, %v807
        %v878 = vpop.permute.xlu0 %877
        %881 = vset.pattern.permute.xlu0 0
        %882 = vperm.xlu0 %881, %v808
        %v883 = vpop.permute.xlu0 %882
        %886 = vset.pattern.permute.xlu0 0
        %887 = vperm.xlu0 %886, %v809
        %v888 = vpop.permute.xlu0 %887
        %891 = vset.pattern.permute.xlu0 0
        %892 = vperm.xlu0 %891, %v810
        %v893 = vpop.permute.xlu0 %892
        %896 = vset.pattern.permute.xlu0 0
        %897 = vperm.xlu0 %896, %v811
        %v898 = vpop.permute.xlu0 %897
        %901 = vset.pattern.permute.xlu0 0
        %902 = vperm.xlu0 %901, %v812
        %v903 = vpop.permute.xlu0 %902
        %906 = vset.pattern.permute.xlu0 0
        %907 = vperm.xlu0 %906, %v813
        %v908 = vpop.permute.xlu0 %907
        %911 = vset.pattern.permute.xlu0 0
        %912 = vperm.xlu0 %911, %v814
        %v913 = vpop.permute.xlu0 %912
        %916 = vset.pattern.permute.xlu0 0
        %917 = vperm.xlu0 %916, %v815
        %v918 = vpop.permute.xlu0 %917
        %921 = vset.pattern.permute.xlu0 0
        %922 = vperm.xlu0 %921, %v816
        %v923 = vpop.permute.xlu0 %922
        %926 = vset.pattern.permute.xlu0 0
        %927 = vperm.xlu0 %926, %v817
        %v928 = vpop.permute.xlu0 %927
        %930 = vmatpush.msra.mxu0 %v849
        %931 = vmatpush.msra.mxu0 %v848
        %932 = vmatpush.msra.mxu0 %v847
        %933 = vmatpush.msra.mxu0 %v846
        %934 = vmatpush.msra.mxu0 %v845
        %935 = vmatpush.msra.mxu0 %v844
        %936 = vmatpush.msra.mxu0 %v843
        %937 = vmatpush.msra.mxu0 %v842
        %938 = vmatpush.msra.mxu0 %v841
        %939 = vmatpush.msra.mxu0 %v840
        %940 = vmatpush.msra.mxu0 %v839
        %941 = vmatpush.msra.mxu0 %v838
        %942 = vmatpush.msra.mxu0 %v837
        %943 = vmatpush.msra.mxu0 %v836
        %944 = vmatpush.msra.mxu0 %v835
        %945 = vmatpush.msra.mxu0 %v834
        %946 = vmatmul.f32.gmra.mxu0 %v818
        %v947 = vpop.f32.mrf.mxu0
        %v948 = vadd.f32 %v853, %v947
        %949 = vmatmul.f32.gmra.mxu0 %v819
        %v950 = vpop.f32.mrf.mxu0
        %v951 = vadd.f32 %v858, %v950
        %952 = vmatmul.f32.gmra.mxu0 %v820
        %v953 = vpop.f32.mrf.mxu0
        %v954 = vadd.f32 %v863, %v953
        %955 = vmatmul.f32.gmra.mxu0 %v821
        %v956 = vpop.f32.mrf.mxu0
        %v957 = vadd.f32 %v868, %v956
        %958 = vmatmul.f32.gmra.mxu0 %v822
        %v959 = vpop.f32.mrf.mxu0
        %v960 = vadd.f32 %v873, %v959
        %961 = vmatmul.f32.gmra.mxu0 %v823
        %v962 = vpop.f32.mrf.mxu0
        %v963 = vadd.f32 %v878, %v962
        %964 = vmatmul.f32.gmra.mxu0 %v824
        %v965 = vpop.f32.mrf.mxu0
        %v966 = vadd.f32 %v883, %v965
        %967 = vmatmul.f32.gmra.mxu0 %v825
        %v968 = vpop.f32.mrf.mxu0
        %v969 = vadd.f32 %v888, %v968
        %970 = vmatmul.f32.gmra.mxu0 %v826
        %v971 = vpop.f32.mrf.mxu0
        %v972 = vadd.f32 %v893, %v971
        %973 = vmatmul.f32.gmra.mxu0 %v827
        %v974 = vpop.f32.mrf.mxu0
        %v975 = vadd.f32 %v898, %v974
        %976 = vmatmul.f32.gmra.mxu0 %v828
        %v977 = vpop.f32.mrf.mxu0
        %v978 = vadd.f32 %v903, %v977
        %979 = vmatmul.f32.gmra.mxu0 %v829
        %v980 = vpop.f32.mrf.mxu0
        %v981 = vadd.f32 %v908, %v980
        %982 = vmatmul.f32.gmra.mxu0 %v830
        %v983 = vpop.f32.mrf.mxu0
        %v984 = vadd.f32 %v913, %v983
        %985 = vmatmul.f32.gmra.mxu0 %v831
        %v986 = vpop.f32.mrf.mxu0
        %v987 = vadd.f32 %v918, %v986
        %988 = vmatmul.f32.gmra.mxu0 %v832
        %v989 = vpop.f32.mrf.mxu0
        %v990 = vadd.f32 %v923, %v989
        %991 = vmatmul.f32.gmra.mxu0 %v833
        %v992 = vpop.f32.mrf.mxu0
        %v993 = vadd.f32 %v928, %v992
        %994 = vdwg.mxu0
        %v995 = vmax.f32 %v948, 0.0
        %v996 = vmax.f32 %v951, 0.0
        %v997 = vmax.f32 %v954, 0.0
        %v998 = vmax.f32 %v957, 0.0
        %v999 = vmax.f32 %v960, 0.0
        %v1000 = vmax.f32 %v963, 0.0
        %v1001 = vmax.f32 %v966, 0.0
        %v1002 = vmax.f32 %v969, 0.0
        %v1003 = vmax.f32 %v972, 0.0
        %v1004 = vmax.f32 %v975, 0.0
        %v1005 = vmax.f32 %v978, 0.0
        %v1006 = vmax.f32 %v981, 0.0
        %v1007 = vmax.f32 %v984, 0.0
        %v1008 = vmax.f32 %v987, 0.0
        %v1009 = vmax.f32 %v990, 0.0
        %v1010 = vmax.f32 %v993, 0.0
        %v1011 = vld [vmem:[#allocation7] sm:$0xff]
        %v1012 = vld [vmem:[#allocation7 + $0x8] sm:$0xff]
        %v1013 = vld [vmem:[#allocation7 + $0x10] sm:$0xff]
        %v1014 = vld [vmem:[#allocation7 + $0x18] sm:$0xff]
        %v1015 = vld [vmem:[#allocation7 + $0x20] sm:$0xff]
        %v1016 = vld [vmem:[#allocation7 + $0x28] sm:$0xff]
        %v1017 = vld [vmem:[#allocation7 + $0x30] sm:$0xff]
        %v1018 = vld [vmem:[#allocation7 + $0x38] sm:$0xff]
        %v1019 = vld [vmem:[#allocation7 + $0x40] sm:$0xff]
        %v1020 = vld [vmem:[#allocation7 + $0x48] sm:$0xff]
        %v1021 = vld [vmem:[#allocation7 + $0x50] sm:$0xff]
        %v1022 = vld [vmem:[#allocation7 + $0x58] sm:$0xff]
        %v1023 = vld [vmem:[#allocation7 + $0x60] sm:$0xff]
        %v1024 = vld [vmem:[#allocation7 + $0x68] sm:$0xff]
        %v1025 = vld [vmem:[#allocation7 + $0x70] sm:$0xff]
        %v1026 = vld [vmem:[#allocation7 + $0x78] sm:$0xff]
        %1027 = vset.pattern.permute.xlu0 1
        %1028 = vperm.xlu0 %1027, %v802
        %v1029 = vpop.permute.xlu0 %1028
        %1031 = vset.pattern.permute.xlu0 1
        %1032 = vperm.xlu0 %1031, %v803
        %v1033 = vpop.permute.xlu0 %1032
        %1035 = vset.pattern.permute.xlu0 1
        %1036 = vperm.xlu0 %1035, %v804
        %v1037 = vpop.permute.xlu0 %1036
        %1039 = vset.pattern.permute.xlu0 1
        %1040 = vperm.xlu0 %1039, %v805
        %v1041 = vpop.permute.xlu0 %1040
        %1043 = vset.pattern.permute.xlu0 1
        %1044 = vperm.xlu0 %1043, %v806
        %v1045 = vpop.permute.xlu0 %1044
        %1047 = vset.pattern.permute.xlu0 1
        %1048 = vperm.xlu0 %1047, %v807
        %v1049 = vpop.permute.xlu0 %1048
        %1051 = vset.pattern.permute.xlu0 1
        %1052 = vperm.xlu0 %1051, %v808
        %v1053 = vpop.permute.xlu0 %1052
        %1055 = vset.pattern.permute.xlu0 1
        %1056 = vperm.xlu0 %1055, %v809
        %v1057 = vpop.permute.xlu0 %1056
        %1059 = vset.pattern.permute.xlu0 1
        %1060 = vperm.xlu0 %1059, %v810
        %v1061 = vpop.permute.xlu0 %1060
        %1063 = vset.pattern.permute.xlu0 1
        %1064 = vperm.xlu0 %1063, %v811
        %v1065 = vpop.permute.xlu0 %1064
        %1067 = vset.pattern.permute.xlu0 1
        %1068 = vperm.xlu0 %1067, %v812
        %v1069 = vpop.permute.xlu0 %1068
        %1071 = vset.pattern.permute.xlu0 1
        %1072 = vperm.xlu0 %1071, %v813
        %v1073 = vpop.permute.xlu0 %1072
        %1075 = vset.pattern.permute.xlu0 1
        %1076 = vperm.xlu0 %1075, %v814
        %v1077 = vpop.permute.xlu0 %1076
        %1079 = vset.pattern.permute.xlu0 1
        %1080 = vperm.xlu0 %1079, %v815
        %v1081 = vpop.permute.xlu0 %1080
        %1083 = vset.pattern.permute.xlu0 1
        %1084 = vperm.xlu0 %1083, %v816
        %v1085 = vpop.permute.xlu0 %1084
        %1087 = vset.pattern.permute.xlu0 1
        %1088 = vperm.xlu0 %1087, %v817
        %v1089 = vpop.permute.xlu0 %1088
        %1091 = vmatpush.msra.mxu0 %v1010
        %1092 = vmatpush.msra.mxu0 %v1009
        %1093 = vmatpush.msra.mxu0 %v1008
        %1094 = vmatpush.msra.mxu0 %v1007
        %1095 = vmatpush.msra.mxu0 %v1006
        %1096 = vmatpush.msra.mxu0 %v1005
        %1097 = vmatpush.msra.mxu0 %v1004
        %1098 = vmatpush.msra.mxu0 %v1003
        %1099 = vmatpush.msra.mxu0 %v1002
        %1100 = vmatpush.msra.mxu0 %v1001
        %1101 = vmatpush.msra.mxu0 %v1000
        %1102 = vmatpush.msra.mxu0 %v999
        %1103 = vmatpush.msra.mxu0 %v998
        %1104 = vmatpush.msra.mxu0 %v997
        %1105 = vmatpush.msra.mxu0 %v996
        %1106 = vmatpush.msra.mxu0 %v995
        %1107 = vmatmul.f32.gmra.mxu0 %v1011
        %v1108 = vpop.f32.mrf.mxu0
        %v1109 = vadd.f32 %v1029, %v1108
        %1110 = vmatmul.f32.gmra.mxu0 %v1012
        %v1111 = vpop.f32.mrf.mxu0
        %v1112 = vadd.f32 %v1033, %v1111
        %1113 = vmatmul.f32.gmra.mxu0 %v1013
        %v1114 = vpop.f32.mrf.mxu0
        %v1115 = vadd.f32 %v1037, %v1114
        %1116 = vmatmul.f32.gmra.mxu0 %v1014
        %v1117 = vpop.f32.mrf.mxu0
        %v1118 = vadd.f32 %v1041, %v1117
        %1119 = vmatmul.f32.gmra.mxu0 %v1015
        %v1120 = vpop.f32.mrf.mxu0
        %v1121 = vadd.f32 %v1045, %v1120
        %1122 = vmatmul.f32.gmra.mxu0 %v1016
        %v1123 = vpop.f32.mrf.mxu0
        %v1124 = vadd.f32 %v1049, %v1123
        %1125 = vmatmul.f32.gmra.mxu0 %v1017
        %v1126 = vpop.f32.mrf.mxu0
        %v1127 = vadd.f32 %v1053, %v1126
        %1128 = vmatmul.f32.gmra.mxu0 %v1018
        %v1129 = vpop.f32.mrf.mxu0
        %v1130 = vadd.f32 %v1057, %v1129
        %1131 = vmatmul.f32.gmra.mxu0 %v1019
        %v1132 = vpop.f32.mrf.mxu0
        %v1133 = vadd.f32 %v1061, %v1132
        %1134 = vmatmul.f32.gmra.mxu0 %v1020
        %v1135 = vpop.f32.mrf.mxu0
        %v1136 = vadd.f32 %v1065, %v1135
        %1137 = vmatmul.f32.gmra.mxu0 %v1021
        %v1138 = vpop.f32.mrf.mxu0
        %v1139 = vadd.f32 %v1069, %v1138
        %1140 = vmatmul.f32.gmra.mxu0 %v1022
        %v1141 = vpop.f32.mrf.mxu0
        %v1142 = vadd.f32 %v1073, %v1141
        %1143 = vmatmul.f32.gmra.mxu0 %v1023
        %v1144 = vpop.f32.mrf.mxu0
        %v1145 = vadd.f32 %v1077, %v1144
        %1146 = vmatmul.f32.gmra.mxu0 %v1024
        %v1147 = vpop.f32.mrf.mxu0
        %v1148 = vadd.f32 %v1081, %v1147
        %1149 = vmatmul.f32.gmra.mxu0 %v1025
        %v1150 = vpop.f32.mrf.mxu0
        %v1151 = vadd.f32 %v1085, %v1150
        %1152 = vmatmul.f32.gmra.mxu0 %v1026
        %v1153 = vpop.f32.mrf.mxu0
        %v1154 = vadd.f32 %v1089, %v1153
        %1155 = vdwg.mxu0
        %1172 = vrot.lane.b32.xlu0 %v1109, 124
        %v1173 = vpop.permute.xlu0 %1172
        %1174 = vrot.lane.b32.xlu0 %v1112, 124
        %v1175 = vpop.permute.xlu0 %1174
        %1176 = vrot.lane.b32.xlu0 %v1115, 124
        %v1177 = vpop.permute.xlu0 %1176
        %1178 = vrot.lane.b32.xlu0 %v1118, 124
        %v1179 = vpop.permute.xlu0 %1178
        %1180 = vrot.lane.b32.xlu0 %v1121, 124
        %v1181 = vpop.permute.xlu0 %1180
        %1182 = vrot.lane.b32.xlu0 %v1124, 124
        %v1183 = vpop.permute.xlu0 %1182
        %1184 = vrot.lane.b32.xlu0 %v1127, 124
        %v1185 = vpop.permute.xlu0 %1184
        %1186 = vrot.lane.b32.xlu0 %v1130, 124
        %v1187 = vpop.permute.xlu0 %1186
        %1188 = vrot.lane.b32.xlu0 %v1133, 124
        %v1189 = vpop.permute.xlu0 %1188
        %1190 = vrot.lane.b32.xlu0 %v1136, 124
        %v1191 = vpop.permute.xlu0 %1190
        %1192 = vrot.lane.b32.xlu0 %v1139, 124
        %v1193 = vpop.permute.xlu0 %1192
        %1194 = vrot.lane.b32.xlu0 %v1142, 124
        %v1195 = vpop.permute.xlu0 %1194
        %1196 = vrot.lane.b32.xlu0 %v1145, 124
        %v1197 = vpop.permute.xlu0 %1196
        %1198 = vrot.lane.b32.xlu0 %v1148, 124
        %v1199 = vpop.permute.xlu0 %1198
        %1200 = vrot.lane.b32.xlu0 %v1151, 124
        %v1201 = vpop.permute.xlu0 %1200
        %1202 = vrot.lane.b32.xlu0 %v1154, 124
        %v1203 = vpop.permute.xlu0 %1202
        %v1220 = vadd.f32 %v1109, %v1173
        %v1221 = vadd.f32 %v1112, %v1175
        %v1222 = vadd.f32 %v1115, %v1177
        %v1223 = vadd.f32 %v1118, %v1179
        %v1224 = vadd.f32 %v1121, %v1181
        %v1225 = vadd.f32 %v1124, %v1183
        %v1226 = vadd.f32 %v1127, %v1185
        %v1227 = vadd.f32 %v1130, %v1187
        %v1228 = vadd.f32 %v1133, %v1189
        %v1229 = vadd.f32 %v1136, %v1191
        %v1230 = vadd.f32 %v1139, %v1193
        %v1231 = vadd.f32 %v1142, %v1195
        %v1232 = vadd.f32 %v1145, %v1197
        %v1233 = vadd.f32 %v1148, %v1199
        %v1234 = vadd.f32 %v1151, %v1201
        %v1235 = vadd.f32 %v1154, %v1203
        %v1236 = vxor.u32 %v1220, 2147483648
        %v1237 = vxor.u32 %v1221, 2147483648
        %v1238 = vxor.u32 %v1222, 2147483648
        %v1239 = vxor.u32 %v1223, 2147483648
        %v1240 = vxor.u32 %v1224, 2147483648
        %v1241 = vxor.u32 %v1225, 2147483648
        %v1242 = vxor.u32 %v1226, 2147483648
        %v1243 = vxor.u32 %v1227, 2147483648
        %v1244 = vxor.u32 %v1228, 2147483648
        %v1245 = vxor.u32 %v1229, 2147483648
        %v1246 = vxor.u32 %v1230, 2147483648
        %v1247 = vxor.u32 %v1231, 2147483648
        %v1248 = vxor.u32 %v1232, 2147483648
        %v1249 = vxor.u32 %v1233, 2147483648
        %v1250 = vxor.u32 %v1234, 2147483648
        %v1251 = vxor.u32 %v1235, 2147483648
        %v1252 = vmul.f32 %v1236, 1.442695
        %v1253 = vpow.pop %v1252
        %v1254 = vmul.f32 %v1237, 1.442695
        %v1255 = vpow.pop %v1254
        %v1256 = vmul.f32 %v1238, 1.442695
        %v1257 = vpow.pop %v1256
        %v1258 = vmul.f32 %v1239, 1.442695
        %v1259 = vpow.pop %v1258
        %v1260 = vmul.f32 %v1240, 1.442695
        %v1261 = vpow.pop %v1260
        %v1262 = vmul.f32 %v1241, 1.442695
        %v1263 = vpow.pop %v1262
        %v1264 = vmul.f32 %v1242, 1.442695
        %v1265 = vpow.pop %v1264
        %v1266 = vmul.f32 %v1243, 1.442695
        %v1267 = vpow.pop %v1266
        %v1268 = vmul.f32 %v1244, 1.442695
        %v1269 = vpow.pop %v1268
        %v1270 = vmul.f32 %v1245, 1.442695
        %v1271 = vpow.pop %v1270
        %v1272 = vmul.f32 %v1246, 1.442695
        %v1273 = vpow.pop %v1272
        %v1274 = vmul.f32 %v1247, 1.442695
        %v1275 = vpow.pop %v1274
        %v1276 = vmul.f32 %v1248, 1.442695
        %v1277 = vpow.pop %v1276
        %v1278 = vmul.f32 %v1249, 1.442695
        %v1279 = vpow.pop %v1278
        %v1280 = vmul.f32 %v1250, 1.442695
        %v1281 = vpow.pop %v1280
        %v1282 = vmul.f32 %v1251, 1.442695
        %v1283 = vpow.pop %v1282
        %v1284 = vadd.f32 %v1253, 1.0
        %v1285 = vadd.f32 %v1255, 1.0
        %v1286 = vadd.f32 %v1257, 1.0
        %v1287 = vadd.f32 %v1259, 1.0
        %v1288 = vadd.f32 %v1261, 1.0
        %v1289 = vadd.f32 %v1263, 1.0
        %v1290 = vadd.f32 %v1265, 1.0
        %v1291 = vadd.f32 %v1267, 1.0
        %v1292 = vadd.f32 %v1269, 1.0
        %v1293 = vadd.f32 %v1271, 1.0
        %v1294 = vadd.f32 %v1273, 1.0
        %v1295 = vadd.f32 %v1275, 1.0
        %v1296 = vadd.f32 %v1277, 1.0
        %v1297 = vadd.f32 %v1279, 1.0
        %v1298 = vadd.f32 %v1281, 1.0
        %v1299 = vadd.f32 %v1283, 1.0
        %v1300 = vrcp.pop %v1284
        %v1301 = vmul.f32 %v1284, %v1300
        %v1302 = vsub.f32 1.0, %v1301
        %v1303 = vmul.f32 %v1300, %v1302
        %v1304 = vadd.f32 %v1300, %v1303
        %vm1305 = vweird.f32 %v1284
        %vm1306 = vweird.f32 %v1300
        %vm1307 = vmor %vm1305, %vm1306
        %v1308 = vsel %vm1307, %v1300, %v1304
        %v1309 = vand.u32 2147483647, %v1284
        %vm1310 = vcmp.eq.f32.partialorder %v1309, 8.507059e+37
        %v1311 = vand.u32 %v1284, 2147483648
        %v1312 = vor.u32 1.1754944e-38, %v1311
        %v1313 = vsel %vm1310, %v1312, %v1308
        %v1314 = vmul.f32 1.0, %v1313
        %v1315 = vrcp.pop %v1285
        %v1316 = vmul.f32 %v1285, %v1315
        %v1317 = vsub.f32 1.0, %v1316
        %v1318 = vmul.f32 %v1315, %v1317
        %v1319 = vadd.f32 %v1315, %v1318
        %vm1320 = vweird.f32 %v1285
        %vm1321 = vweird.f32 %v1315
        %vm1322 = vmor %vm1320, %vm1321
        %v1323 = vsel %vm1322, %v1315, %v1319
        %v1324 = vand.u32 2147483647, %v1285
        %vm1325 = vcmp.eq.f32.partialorder %v1324, 8.507059e+37
        %v1326 = vand.u32 %v1285, 2147483648
        %v1327 = vor.u32 1.1754944e-38, %v1326
        %v1328 = vsel %vm1325, %v1327, %v1323
        %v1329 = vmul.f32 1.0, %v1328
        %v1330 = vrcp.pop %v1286
        %v1331 = vmul.f32 %v1286, %v1330
        %v1332 = vsub.f32 1.0, %v1331
        %v1333 = vmul.f32 %v1330, %v1332
        %v1334 = vadd.f32 %v1330, %v1333
        %vm1335 = vweird.f32 %v1286
        %vm1336 = vweird.f32 %v1330
        %vm1337 = vmor %vm1335, %vm1336
        %v1338 = vsel %vm1337, %v1330, %v1334
        %v1339 = vand.u32 2147483647, %v1286
        %vm1340 = vcmp.eq.f32.partialorder %v1339, 8.507059e+37
        %v1341 = vand.u32 %v1286, 2147483648
        %v1342 = vor.u32 1.1754944e-38, %v1341
        %v1343 = vsel %vm1340, %v1342, %v1338
        %v1344 = vmul.f32 1.0, %v1343
        %v1345 = vrcp.pop %v1287
        %v1346 = vmul.f32 %v1287, %v1345
        %v1347 = vsub.f32 1.0, %v1346
        %v1348 = vmul.f32 %v1345, %v1347
        %v1349 = vadd.f32 %v1345, %v1348
        %vm1350 = vweird.f32 %v1287
        %vm1351 = vweird.f32 %v1345
        %vm1352 = vmor %vm1350, %vm1351
        %v1353 = vsel %vm1352, %v1345, %v1349
        %v1354 = vand.u32 2147483647, %v1287
        %vm1355 = vcmp.eq.f32.partialorder %v1354, 8.507059e+37
        %v1356 = vand.u32 %v1287, 2147483648
        %v1357 = vor.u32 1.1754944e-38, %v1356
        %v1358 = vsel %vm1355, %v1357, %v1353
        %v1359 = vmul.f32 1.0, %v1358
        %v1360 = vrcp.pop %v1288
        %v1361 = vmul.f32 %v1288, %v1360
        %v1362 = vsub.f32 1.0, %v1361
        %v1363 = vmul.f32 %v1360, %v1362
        %v1364 = vadd.f32 %v1360, %v1363
        %vm1365 = vweird.f32 %v1288
        %vm1366 = vweird.f32 %v1360
        %vm1367 = vmor %vm1365, %vm1366
        %v1368 = vsel %vm1367, %v1360, %v1364
        %v1369 = vand.u32 2147483647, %v1288
        %vm1370 = vcmp.eq.f32.partialorder %v1369, 8.507059e+37
        %v1371 = vand.u32 %v1288, 2147483648
        %v1372 = vor.u32 1.1754944e-38, %v1371
        %v1373 = vsel %vm1370, %v1372, %v1368
        %v1374 = vmul.f32 1.0, %v1373
        %v1375 = vrcp.pop %v1289
        %v1376 = vmul.f32 %v1289, %v1375
        %v1377 = vsub.f32 1.0, %v1376
        %v1378 = vmul.f32 %v1375, %v1377
        %v1379 = vadd.f32 %v1375, %v1378
        %vm1380 = vweird.f32 %v1289
        %vm1381 = vweird.f32 %v1375
        %vm1382 = vmor %vm1380, %vm1381
        %v1383 = vsel %vm1382, %v1375, %v1379
        %v1384 = vand.u32 2147483647, %v1289
        %vm1385 = vcmp.eq.f32.partialorder %v1384, 8.507059e+37
        %v1386 = vand.u32 %v1289, 2147483648
        %v1387 = vor.u32 1.1754944e-38, %v1386
        %v1388 = vsel %vm1385, %v1387, %v1383
        %v1389 = vmul.f32 1.0, %v1388
        %v1390 = vrcp.pop %v1290
        %v1391 = vmul.f32 %v1290, %v1390
        %v1392 = vsub.f32 1.0, %v1391
        %v1393 = vmul.f32 %v1390, %v1392
        %v1394 = vadd.f32 %v1390, %v1393
        %vm1395 = vweird.f32 %v1290
        %vm1396 = vweird.f32 %v1390
        %vm1397 = vmor %vm1395, %vm1396
        %v1398 = vsel %vm1397, %v1390, %v1394
        %v1399 = vand.u32 2147483647, %v1290
        %vm1400 = vcmp.eq.f32.partialorder %v1399, 8.507059e+37
        %v1401 = vand.u32 %v1290, 2147483648
        %v1402 = vor.u32 1.1754944e-38, %v1401
        %v1403 = vsel %vm1400, %v1402, %v1398
        %v1404 = vmul.f32 1.0, %v1403
        %v1405 = vrcp.pop %v1291
        %v1406 = vmul.f32 %v1291, %v1405
        %v1407 = vsub.f32 1.0, %v1406
        %v1408 = vmul.f32 %v1405, %v1407
        %v1409 = vadd.f32 %v1405, %v1408
        %vm1410 = vweird.f32 %v1291
        %vm1411 = vweird.f32 %v1405
        %vm1412 = vmor %vm1410, %vm1411
        %v1413 = vsel %vm1412, %v1405, %v1409
        %v1414 = vand.u32 2147483647, %v1291
        %vm1415 = vcmp.eq.f32.partialorder %v1414, 8.507059e+37
        %v1416 = vand.u32 %v1291, 2147483648
        %v1417 = vor.u32 1.1754944e-38, %v1416
        %v1418 = vsel %vm1415, %v1417, %v1413
        %v1419 = vmul.f32 1.0, %v1418
        %v1420 = vrcp.pop %v1292
        %v1421 = vmul.f32 %v1292, %v1420
        %v1422 = vsub.f32 1.0, %v1421
        %v1423 = vmul.f32 %v1420, %v1422
        %v1424 = vadd.f32 %v1420, %v1423
        %vm1425 = vweird.f32 %v1292
        %vm1426 = vweird.f32 %v1420
        %vm1427 = vmor %vm1425, %vm1426
        %v1428 = vsel %vm1427, %v1420, %v1424
        %v1429 = vand.u32 2147483647, %v1292
        %vm1430 = vcmp.eq.f32.partialorder %v1429, 8.507059e+37
        %v1431 = vand.u32 %v1292, 2147483648
        %v1432 = vor.u32 1.1754944e-38, %v1431
        %v1433 = vsel %vm1430, %v1432, %v1428
        %v1434 = vmul.f32 1.0, %v1433
        %v1435 = vrcp.pop %v1293
        %v1436 = vmul.f32 %v1293, %v1435
        %v1437 = vsub.f32 1.0, %v1436
        %v1438 = vmul.f32 %v1435, %v1437
        %v1439 = vadd.f32 %v1435, %v1438
        %vm1440 = vweird.f32 %v1293
        %vm1441 = vweird.f32 %v1435
        %vm1442 = vmor %vm1440, %vm1441
        %v1443 = vsel %vm1442, %v1435, %v1439
        %v1444 = vand.u32 2147483647, %v1293
        %vm1445 = vcmp.eq.f32.partialorder %v1444, 8.507059e+37
        %v1446 = vand.u32 %v1293, 2147483648
        %v1447 = vor.u32 1.1754944e-38, %v1446
        %v1448 = vsel %vm1445, %v1447, %v1443
        %v1449 = vmul.f32 1.0, %v1448
        %v1450 = vrcp.pop %v1294
        %v1451 = vmul.f32 %v1294, %v1450
        %v1452 = vsub.f32 1.0, %v1451
        %v1453 = vmul.f32 %v1450, %v1452
        %v1454 = vadd.f32 %v1450, %v1453
        %vm1455 = vweird.f32 %v1294
        %vm1456 = vweird.f32 %v1450
        %vm1457 = vmor %vm1455, %vm1456
        %v1458 = vsel %vm1457, %v1450, %v1454
        %v1459 = vand.u32 2147483647, %v1294
        %vm1460 = vcmp.eq.f32.partialorder %v1459, 8.507059e+37
        %v1461 = vand.u32 %v1294, 2147483648
        %v1462 = vor.u32 1.1754944e-38, %v1461
        %v1463 = vsel %vm1460, %v1462, %v1458
        %v1464 = vmul.f32 1.0, %v1463
        %v1465 = vrcp.pop %v1295
        %v1466 = vmul.f32 %v1295, %v1465
        %v1467 = vsub.f32 1.0, %v1466
        %v1468 = vmul.f32 %v1465, %v1467
        %v1469 = vadd.f32 %v1465, %v1468
        %vm1470 = vweird.f32 %v1295
        %vm1471 = vweird.f32 %v1465
        %vm1472 = vmor %vm1470, %vm1471
        %v1473 = vsel %vm1472, %v1465, %v1469
        %v1474 = vand.u32 2147483647, %v1295
        %vm1475 = vcmp.eq.f32.partialorder %v1474, 8.507059e+37
        %v1476 = vand.u32 %v1295, 2147483648
        %v1477 = vor.u32 1.1754944e-38, %v1476
        %v1478 = vsel %vm1475, %v1477, %v1473
        %v1479 = vmul.f32 1.0, %v1478
        %v1480 = vrcp.pop %v1296
        %v1481 = vmul.f32 %v1296, %v1480
        %v1482 = vsub.f32 1.0, %v1481
        %v1483 = vmul.f32 %v1480, %v1482
        %v1484 = vadd.f32 %v1480, %v1483
        %vm1485 = vweird.f32 %v1296
        %vm1486 = vweird.f32 %v1480
        %vm1487 = vmor %vm1485, %vm1486
        %v1488 = vsel %vm1487, %v1480, %v1484
        %v1489 = vand.u32 2147483647, %v1296
        %vm1490 = vcmp.eq.f32.partialorder %v1489, 8.507059e+37
        %v1491 = vand.u32 %v1296, 2147483648
        %v1492 = vor.u32 1.1754944e-38, %v1491
        %v1493 = vsel %vm1490, %v1492, %v1488
        %v1494 = vmul.f32 1.0, %v1493
        %v1495 = vrcp.pop %v1297
        %v1496 = vmul.f32 %v1297, %v1495
        %v1497 = vsub.f32 1.0, %v1496
        %v1498 = vmul.f32 %v1495, %v1497
        %v1499 = vadd.f32 %v1495, %v1498
        %vm1500 = vweird.f32 %v1297
        %vm1501 = vweird.f32 %v1495
        %vm1502 = vmor %vm1500, %vm1501
        %v1503 = vsel %vm1502, %v1495, %v1499
        %v1504 = vand.u32 2147483647, %v1297
        %vm1505 = vcmp.eq.f32.partialorder %v1504, 8.507059e+37
        %v1506 = vand.u32 %v1297, 2147483648
        %v1507 = vor.u32 1.1754944e-38, %v1506
        %v1508 = vsel %vm1505, %v1507, %v1503
        %v1509 = vmul.f32 1.0, %v1508
        %v1510 = vrcp.pop %v1298
        %v1511 = vmul.f32 %v1298, %v1510
        %v1512 = vsub.f32 1.0, %v1511
        %v1513 = vmul.f32 %v1510, %v1512
        %v1514 = vadd.f32 %v1510, %v1513
        %vm1515 = vweird.f32 %v1298
        %vm1516 = vweird.f32 %v1510
        %vm1517 = vmor %vm1515, %vm1516
        %v1518 = vsel %vm1517, %v1510, %v1514
        %v1519 = vand.u32 2147483647, %v1298
        %vm1520 = vcmp.eq.f32.partialorder %v1519, 8.507059e+37
        %v1521 = vand.u32 %v1298, 2147483648
        %v1522 = vor.u32 1.1754944e-38, %v1521
        %v1523 = vsel %vm1520, %v1522, %v1518
        %v1524 = vmul.f32 1.0, %v1523
        %v1525 = vrcp.pop %v1299
        %v1526 = vmul.f32 %v1299, %v1525
        %v1527 = vsub.f32 1.0, %v1526
        %v1528 = vmul.f32 %v1525, %v1527
        %v1529 = vadd.f32 %v1525, %v1528
        %vm1530 = vweird.f32 %v1299
        %vm1531 = vweird.f32 %v1525
        %vm1532 = vmor %vm1530, %vm1531
        %v1533 = vsel %vm1532, %v1525, %v1529
        %v1534 = vand.u32 2147483647, %v1299
        %vm1535 = vcmp.eq.f32.partialorder %v1534, 8.507059e+37
        %v1536 = vand.u32 %v1299, 2147483648
        %v1537 = vor.u32 1.1754944e-38, %v1536
        %v1538 = vsel %vm1535, %v1537, %v1533
        %v1539 = vmul.f32 1.0, %v1538
        %s1540 = sld [smem:[#allocation9]]
        %s1541 = sld [smem:[#allocation9 + $0x1]]
        %s1542 = sld [smem:[#allocation9 + $0x2]]
        %v1543 = vld [vmem:[%s238] sm:$0xff]
        %v1544 = vld [vmem:[%s238 + $0x8] sm:$0xff]
        %v1545 = vld [vmem:[%s238 + $0x10] sm:$0xff]
        %v1546 = vld [vmem:[%s238 + $0x18] sm:$0xff]
        %v1547 = vld [vmem:[%s238 + $0x20] sm:$0xff]
        %v1548 = vld [vmem:[%s238 + $0x28] sm:$0xff]
        %v1549 = vld [vmem:[%s238 + $0x30] sm:$0xff]
        %v1550 = vld [vmem:[%s238 + $0x38] sm:$0xff]
        %v1551 = vld [vmem:[%s238 + $0x40] sm:$0xff]
        %v1552 = vld [vmem:[%s238 + $0x48] sm:$0xff]
        %v1553 = vld [vmem:[%s238 + $0x50] sm:$0xff]
        %v1554 = vld [vmem:[%s238 + $0x58] sm:$0xff]
        %v1555 = vld [vmem:[%s238 + $0x60] sm:$0xff]
        %v1556 = vld [vmem:[%s238 + $0x68] sm:$0xff]
        %v1557 = vld [vmem:[%s238 + $0x70] sm:$0xff]
        %v1558 = vld [vmem:[%s238 + $0x78] sm:$0xff]
        %1560 = vset.pattern.permute.xlu0 0
        %1561 = vperm.xlu0 %1560, %v1314
        %v1562 = vpop.permute.xlu0 %1561
        %1565 = vset.pattern.permute.xlu0 0
        %1566 = vperm.xlu0 %1565, %v1329
        %v1567 = vpop.permute.xlu0 %1566
        %1570 = vset.pattern.permute.xlu0 0
        %1571 = vperm.xlu0 %1570, %v1344
        %v1572 = vpop.permute.xlu0 %1571
        %1575 = vset.pattern.permute.xlu0 0
        %1576 = vperm.xlu0 %1575, %v1359
        %v1577 = vpop.permute.xlu0 %1576
        %1580 = vset.pattern.permute.xlu0 0
        %1581 = vperm.xlu0 %1580, %v1374
        %v1582 = vpop.permute.xlu0 %1581
        %1585 = vset.pattern.permute.xlu0 0
        %1586 = vperm.xlu0 %1585, %v1389
        %v1587 = vpop.permute.xlu0 %1586
        %1590 = vset.pattern.permute.xlu0 0
        %1591 = vperm.xlu0 %1590, %v1404
        %v1592 = vpop.permute.xlu0 %1591
        %1595 = vset.pattern.permute.xlu0 0
        %1596 = vperm.xlu0 %1595, %v1419
        %v1597 = vpop.permute.xlu0 %1596
        %1600 = vset.pattern.permute.xlu0 0
        %1601 = vperm.xlu0 %1600, %v1434
        %v1602 = vpop.permute.xlu0 %1601
        %1605 = vset.pattern.permute.xlu0 0
        %1606 = vperm.xlu0 %1605, %v1449
        %v1607 = vpop.permute.xlu0 %1606
        %1610 = vset.pattern.permute.xlu0 0
        %1611 = vperm.xlu0 %1610, %v1464
        %v1612 = vpop.permute.xlu0 %1611
        %1615 = vset.pattern.permute.xlu0 0
        %1616 = vperm.xlu0 %1615, %v1479
        %v1617 = vpop.permute.xlu0 %1616
        %1620 = vset.pattern.permute.xlu0 0
        %1621 = vperm.xlu0 %1620, %v1494
        %v1622 = vpop.permute.xlu0 %1621
        %1625 = vset.pattern.permute.xlu0 0
        %1626 = vperm.xlu0 %1625, %v1509
        %v1627 = vpop.permute.xlu0 %1626
        %1630 = vset.pattern.permute.xlu0 0
        %1631 = vperm.xlu0 %1630, %v1524
        %v1632 = vpop.permute.xlu0 %1631
        %1635 = vset.pattern.permute.xlu0 0
        %1636 = vperm.xlu0 %1635, %v1539
        %v1637 = vpop.permute.xlu0 %1636
        %v1639 = vmul.f32 %v1543, %v1562
        %v1640 = vmul.f32 %v1544, %v1567
        %v1641 = vmul.f32 %v1545, %v1572
        %v1642 = vmul.f32 %v1546, %v1577
        %v1643 = vmul.f32 %v1547, %v1582
        %v1644 = vmul.f32 %v1548, %v1587
        %v1645 = vmul.f32 %v1549, %v1592
        %v1646 = vmul.f32 %v1550, %v1597
        %v1647 = vmul.f32 %v1551, %v1602
        %v1648 = vmul.f32 %v1552, %v1607
        %v1649 = vmul.f32 %v1553, %v1612
        %v1650 = vmul.f32 %v1554, %v1617
        %v1651 = vmul.f32 %v1555, %v1622
        %v1652 = vmul.f32 %v1556, %v1627
        %v1653 = vmul.f32 %v1557, %v1632
        %v1654 = vmul.f32 %v1558, %v1637
        %v1655 = vmax.f32 %v1639, %v1643
        %v1656 = vmax.f32 %v1640, %v1644
        %v1657 = vmax.f32 %v1641, %v1645
        %v1658 = vmax.f32 %v1642, %v1646
        %v1659 = vmax.f32 %v1655, %v1647
        %v1660 = vmax.f32 %v1656, %v1648
        %v1661 = vmax.f32 %v1657, %v1649
        %v1662 = vmax.f32 %v1658, %v1650
        %v1663 = vmax.f32 %v1659, %v1651
        %v1664 = vmax.f32 %v1660, %v1652
        %v1665 = vmax.f32 %v1661, %v1653
        %v1666 = vmax.f32 %v1662, %v1654
        %v1667 = vmax.f32 %v1663, %v1664
        %v1668 = vmax.f32 %v1665, %v1666
        %v1669 = vmax.f32 %v1667, %v1668
        %v1670 = vrot.slane %v1669, 4
        %v1671 = vmax.f32 %v1669, %v1670
        %v1672 = vrot.slane %v1671, 2
        %v1673 = vmax.f32 %v1671, %v1672
        %v1674 = vrot.slane %v1673, 1
        %v1675 = vmax.f32 %v1673, %v1674
        %v1676 = vadd.f32 %v1639, %v1640
        %v1677 = vadd.f32 %v1676, %v1641
        %v1678 = vadd.f32 %v1677, %v1642
        %v1679 = vadd.f32 %v1678, %v1643
        %v1680 = vadd.f32 %v1679, %v1644
        %v1681 = vadd.f32 %v1680, %v1645
        %v1682 = vadd.f32 %v1681, %v1646
        %v1683 = vadd.f32 %v1682, %v1647
        %v1684 = vadd.f32 %v1683, %v1648
        %v1685 = vadd.f32 %v1684, %v1649
        %v1686 = vadd.f32 %v1685, %v1650
        %v1687 = vadd.f32 %v1686, %v1651
        %v1688 = vadd.f32 %v1687, %v1652
        %v1689 = vadd.f32 %v1688, %v1653
        %v1690 = vadd.f32 %v1689, %v1654
        %v1691 = vrot.slane %v1690, 4
        %v1692 = vadd.f32 %v1690, %v1691
        %v1693 = vrot.slane %v1692, 2
        %v1694 = vadd.f32 %v1692, %v1693
        %v1695 = vrot.slane %v1694, 1
        %v1696 = vadd.f32 %v1694, %v1695
        %v1697 = vmul.f32 %v1696, 0.0078125
        %v1698 = vstv %s1540
        %v1699 = vmul.f32 %v1698, %v1675
        %v1700 = vstv %s1541
        %v1701 = vmul.f32 %v1700, %v1697
        %v1702 = vadd.f32 %v1699, %v1701
        %v1703 = vstv %s1542
        %v1704 = vadd.f32 %v1702, %v1703
        %v1705 = vxor.u32 %v1704, 2147483648
        %v1706 = vmul.f32 %v1705, 1.442695
        %v1707 = vpow.pop %v1706
        %v1708 = vadd.f32 %v1707, 1.0
        %v1709 = vrcp.pop %v1708
        %v1710 = vmul.f32 %v1708, %v1709
        %v1711 = vsub.f32 1.0, %v1710
        %v1712 = vmul.f32 %v1709, %v1711
        %v1713 = vadd.f32 %v1709, %v1712
        %vm1714 = vweird.f32 %v1708
        %vm1715 = vweird.f32 %v1709
        %vm1716 = vmor %vm1714, %vm1715
        %v1717 = vsel %vm1716, %v1709, %v1713
        %v1718 = vand.u32 2147483647, %v1708
        %vm1719 = vcmp.eq.f32.partialorder %v1718, 8.507059e+37
        %v1720 = vand.u32 %v1708, 2147483648
        %v1721 = vor.u32 1.1754944e-38, %v1720
        %v1722 = vsel %vm1719, %v1721, %v1717
        %v1723 = vmul.f32 1.0, %v1722
        %v1724 = vmul.f32 %v1639, %v1723
        %v1725 = vmul.f32 %v1640, %v1723
        %v1726 = vmul.f32 %v1641, %v1723
        %v1727 = vmul.f32 %v1642, %v1723
        %v1728 = vmul.f32 %v1643, %v1723
        %v1729 = vmul.f32 %v1644, %v1723
        %v1730 = vmul.f32 %v1645, %v1723
        %v1731 = vmul.f32 %v1646, %v1723
        %v1732 = vmul.f32 %v1647, %v1723
        %v1733 = vmul.f32 %v1648, %v1723
        %v1734 = vmul.f32 %v1649, %v1723
        %v1735 = vmul.f32 %v1650, %v1723
        %v1736 = vmul.f32 %v1651, %v1723
        %v1737 = vmul.f32 %v1652, %v1723
        %v1738 = vmul.f32 %v1653, %v1723
        %v1739 = vmul.f32 %v1654, %v1723
        %1740 = vst [vmem:[%s276] sm:$0xff] %v1724
        %1741 = vst [vmem:[%s276 + $0x8] sm:$0xff] %v1725
        %1742 = vst [vmem:[%s276 + $0x10] sm:$0xff] %v1726
        %1743 = vst [vmem:[%s276 + $0x18] sm:$0xff] %v1727
        %1744 = vst [vmem:[%s276 + $0x20] sm:$0xff] %v1728
        %1745 = vst [vmem:[%s276 + $0x28] sm:$0xff] %v1729
        %1746 = vst [vmem:[%s276 + $0x30] sm:$0xff] %v1730
        %1747 = vst [vmem:[%s276 + $0x38] sm:$0xff] %v1731
        %1748 = vst [vmem:[%s276 + $0x40] sm:$0xff] %v1732
        %1749 = vst [vmem:[%s276 + $0x48] sm:$0xff] %v1733
        %1750 = vst [vmem:[%s276 + $0x50] sm:$0xff] %v1734
        %1751 = vst [vmem:[%s276 + $0x58] sm:$0xff] %v1735
        %1752 = vst [vmem:[%s276 + $0x60] sm:$0xff] %v1736
        %1753 = vst [vmem:[%s276 + $0x68] sm:$0xff] %v1737
        %1754 = vst [vmem:[%s276 + $0x70] sm:$0xff] %v1738
        %1755 = vst [vmem:[%s276 + $0x78] sm:$0xff] %v1739
        %v1756 = vld [vmem:[%s409] sm:$0xff]
        %v1757 = vld [vmem:[%s409 + $0x8] sm:$0xff]
        %v1758 = vld [vmem:[%s409 + $0x10] sm:$0xff]
        %v1759 = vld [vmem:[%s409 + $0x18] sm:$0xff]
        %v1760 = vld [vmem:[%s409 + $0x20] sm:$0xff]
        %v1761 = vld [vmem:[%s409 + $0x28] sm:$0xff]
        %v1762 = vld [vmem:[%s409 + $0x30] sm:$0xff]
        %v1763 = vld [vmem:[%s409 + $0x38] sm:$0xff]
        %v1764 = vld [vmem:[%s409 + $0x40] sm:$0xff]
        %v1765 = vld [vmem:[%s409 + $0x48] sm:$0xff]
        %v1766 = vld [vmem:[%s409 + $0x50] sm:$0xff]
        %v1767 = vld [vmem:[%s409 + $0x58] sm:$0xff]
        %v1768 = vld [vmem:[%s409 + $0x60] sm:$0xff]
        %v1769 = vld [vmem:[%s409 + $0x68] sm:$0xff]
        %v1770 = vld [vmem:[%s409 + $0x70] sm:$0xff]
        %v1771 = vld [vmem:[%s409 + $0x78] sm:$0xff]
        %1772 = vset.pattern.permute.xlu0 1
        %1773 = vperm.xlu0 %1772, %v1314
        %v1774 = vpop.permute.xlu0 %1773
        %1776 = vset.pattern.permute.xlu0 1
        %1777 = vperm.xlu0 %1776, %v1329
        %v1778 = vpop.permute.xlu0 %1777
        %1780 = vset.pattern.permute.xlu0 1
        %1781 = vperm.xlu0 %1780, %v1344
        %v1782 = vpop.permute.xlu0 %1781
        %1784 = vset.pattern.permute.xlu0 1
        %1785 = vperm.xlu0 %1784, %v1359
        %v1786 = vpop.permute.xlu0 %1785
        %1788 = vset.pattern.permute.xlu0 1
        %1789 = vperm.xlu0 %1788, %v1374
        %v1790 = vpop.permute.xlu0 %1789
        %1792 = vset.pattern.permute.xlu0 1
        %1793 = vperm.xlu0 %1792, %v1389
        %v1794 = vpop.permute.xlu0 %1793
        %1796 = vset.pattern.permute.xlu0 1
        %1797 = vperm.xlu0 %1796, %v1404
        %v1798 = vpop.permute.xlu0 %1797
        %1800 = vset.pattern.permute.xlu0 1
        %1801 = vperm.xlu0 %1800, %v1419
        %v1802 = vpop.permute.xlu0 %1801
        %1804 = vset.pattern.permute.xlu0 1
        %1805 = vperm.xlu0 %1804, %v1434
        %v1806 = vpop.permute.xlu0 %1805
        %1808 = vset.pattern.permute.xlu0 1
        %1809 = vperm.xlu0 %1808, %v1449
        %v1810 = vpop.permute.xlu0 %1809
        %1812 = vset.pattern.permute.xlu0 1
        %1813 = vperm.xlu0 %1812, %v1464
        %v1814 = vpop.permute.xlu0 %1813
        %1816 = vset.pattern.permute.xlu0 1
        %1817 = vperm.xlu0 %1816, %v1479
        %v1818 = vpop.permute.xlu0 %1817
        %1820 = vset.pattern.permute.xlu0 1
        %1821 = vperm.xlu0 %1820, %v1494
        %v1822 = vpop.permute.xlu0 %1821
        %1824 = vset.pattern.permute.xlu0 1
        %1825 = vperm.xlu0 %1824, %v1509
        %v1826 = vpop.permute.xlu0 %1825
        %1828 = vset.pattern.permute.xlu0 1
        %1829 = vperm.xlu0 %1828, %v1524
        %v1830 = vpop.permute.xlu0 %1829
        %1832 = vset.pattern.permute.xlu0 1
        %1833 = vperm.xlu0 %1832, %v1539
        %v1834 = vpop.permute.xlu0 %1833
        %v1836 = vmul.f32 %v1756, %v1774
        %v1837 = vmul.f32 %v1757, %v1778
        %v1838 = vmul.f32 %v1758, %v1782
        %v1839 = vmul.f32 %v1759, %v1786
        %v1840 = vmul.f32 %v1760, %v1790
        %v1841 = vmul.f32 %v1761, %v1794
        %v1842 = vmul.f32 %v1762, %v1798
        %v1843 = vmul.f32 %v1763, %v1802
        %v1844 = vmul.f32 %v1764, %v1806
        %v1845 = vmul.f32 %v1765, %v1810
        %v1846 = vmul.f32 %v1766, %v1814
        %v1847 = vmul.f32 %v1767, %v1818
        %v1848 = vmul.f32 %v1768, %v1822
        %v1849 = vmul.f32 %v1769, %v1826
        %v1850 = vmul.f32 %v1770, %v1830
        %v1851 = vmul.f32 %v1771, %v1834
        %v1852 = vmax.f32 %v1836, %v1840
        %v1853 = vmax.f32 %v1837, %v1841
        %v1854 = vmax.f32 %v1838, %v1842
        %v1855 = vmax.f32 %v1839, %v1843
        %v1856 = vmax.f32 %v1852, %v1844
        %v1857 = vmax.f32 %v1853, %v1845
        %v1858 = vmax.f32 %v1854, %v1846
        %v1859 = vmax.f32 %v1855, %v1847
        %v1860 = vmax.f32 %v1856, %v1848
        %v1861 = vmax.f32 %v1857, %v1849
        %v1862 = vmax.f32 %v1858, %v1850
        %v1863 = vmax.f32 %v1859, %v1851
        %v1864 = vmax.f32 %v1860, %v1861
        %v1865 = vmax.f32 %v1862, %v1863
        %v1866 = vmax.f32 %v1864, %v1865
        %v1867 = vrot.slane %v1866, 4
        %v1868 = vmax.f32 %v1866, %v1867
        %v1869 = vrot.slane %v1868, 2
        %v1870 = vmax.f32 %v1868, %v1869
        %v1871 = vrot.slane %v1870, 1
        %v1872 = vmax.f32 %v1870, %v1871
        %v1873 = vadd.f32 %v1836, %v1837
        %v1874 = vadd.f32 %v1873, %v1838
        %v1875 = vadd.f32 %v1874, %v1839
        %v1876 = vadd.f32 %v1875, %v1840
        %v1877 = vadd.f32 %v1876, %v1841
        %v1878 = vadd.f32 %v1877, %v1842
        %v1879 = vadd.f32 %v1878, %v1843
        %v1880 = vadd.f32 %v1879, %v1844
        %v1881 = vadd.f32 %v1880, %v1845
        %v1882 = vadd.f32 %v1881, %v1846
        %v1883 = vadd.f32 %v1882, %v1847
        %v1884 = vadd.f32 %v1883, %v1848
        %v1885 = vadd.f32 %v1884, %v1849
        %v1886 = vadd.f32 %v1885, %v1850
        %v1887 = vadd.f32 %v1886, %v1851
        %v1888 = vrot.slane %v1887, 4
        %v1889 = vadd.f32 %v1887, %v1888
        %v1890 = vrot.slane %v1889, 2
        %v1891 = vadd.f32 %v1889, %v1890
        %v1892 = vrot.slane %v1891, 1
        %v1893 = vadd.f32 %v1891, %v1892
        %v1894 = vmul.f32 %v1893, 0.0078125
        %v1895 = vmul.f32 %v1698, %v1872
        %v1896 = vmul.f32 %v1700, %v1894
        %v1897 = vadd.f32 %v1895, %v1896
        %v1898 = vadd.f32 %v1897, %v1703
        %v1899 = vxor.u32 %v1898, 2147483648
        %v1900 = vmul.f32 %v1899, 1.442695
        %v1901 = vpow.pop %v1900
        %v1902 = vadd.f32 %v1901, 1.0
        %v1903 = vrcp.pop %v1902
        %v1904 = vmul.f32 %v1902, %v1903
        %v1905 = vsub.f32 1.0, %v1904
        %v1906 = vmul.f32 %v1903, %v1905
        %v1907 = vadd.f32 %v1903, %v1906
        %vm1908 = vweird.f32 %v1902
        %vm1909 = vweird.f32 %v1903
        %vm1910 = vmor %vm1908, %vm1909
        %v1911 = vsel %vm1910, %v1903, %v1907
        %v1912 = vand.u32 2147483647, %v1902
        %vm1913 = vcmp.eq.f32.partialorder %v1912, 8.507059e+37
        %v1914 = vand.u32 %v1902, 2147483648
        %v1915 = vor.u32 1.1754944e-38, %v1914
        %v1916 = vsel %vm1913, %v1915, %v1911
        %v1917 = vmul.f32 1.0, %v1916
        %v1918 = vmul.f32 %v1836, %v1917
        %v1919 = vmul.f32 %v1837, %v1917
        %v1920 = vmul.f32 %v1838, %v1917
        %v1921 = vmul.f32 %v1839, %v1917
        %v1922 = vmul.f32 %v1840, %v1917
        %v1923 = vmul.f32 %v1841, %v1917
        %v1924 = vmul.f32 %v1842, %v1917
        %v1925 = vmul.f32 %v1843, %v1917
        %v1926 = vmul.f32 %v1844, %v1917
        %v1927 = vmul.f32 %v1845, %v1917
        %v1928 = vmul.f32 %v1846, %v1917
        %v1929 = vmul.f32 %v1847, %v1917
        %v1930 = vmul.f32 %v1848, %v1917
        %v1931 = vmul.f32 %v1849, %v1917
        %v1932 = vmul.f32 %v1850, %v1917
        %v1933 = vmul.f32 %v1851, %v1917
        %s1934 = scalar_lea.vmem %s276, 128 [#allocation10]
        %1935 = vst [vmem:[%s1934] sm:$0xff] %v1918
        %1936 = vst [vmem:[%s1934 + $0x8] sm:$0xff] %v1919
        %1937 = vst [vmem:[%s1934 + $0x10] sm:$0xff] %v1920
        %1938 = vst [vmem:[%s1934 + $0x18] sm:$0xff] %v1921
        %1939 = vst [vmem:[%s1934 + $0x20] sm:$0xff] %v1922
        %1940 = vst [vmem:[%s1934 + $0x28] sm:$0xff] %v1923
        %1941 = vst [vmem:[%s1934 + $0x30] sm:$0xff] %v1924
        %1942 = vst [vmem:[%s1934 + $0x38] sm:$0xff] %v1925
        %1943 = vst [vmem:[%s1934 + $0x40] sm:$0xff] %v1926
        %1944 = vst [vmem:[%s1934 + $0x48] sm:$0xff] %v1927
        %1945 = vst [vmem:[%s1934 + $0x50] sm:$0xff] %v1928
        %1946 = vst [vmem:[%s1934 + $0x58] sm:$0xff] %v1929
        %1947 = vst [vmem:[%s1934 + $0x60] sm:$0xff] %v1930
        %1948 = vst [vmem:[%s1934 + $0x68] sm:$0xff] %v1931
        %1949 = vst [vmem:[%s1934 + $0x70] sm:$0xff] %v1932
        %1950 = vst [vmem:[%s1934 + $0x78] sm:$0xff] %v1933
        %v1951 = vld [vmem:[%s540] sm:$0xff]
        %v1952 = vld [vmem:[%s540 + $0x8] sm:$0xff]
        %v1953 = vld [vmem:[%s540 + $0x10] sm:$0xff]
        %v1954 = vld [vmem:[%s540 + $0x18] sm:$0xff]
        %v1955 = vld [vmem:[%s540 + $0x20] sm:$0xff]
        %v1956 = vld [vmem:[%s540 + $0x28] sm:$0xff]
        %v1957 = vld [vmem:[%s540 + $0x30] sm:$0xff]
        %v1958 = vld [vmem:[%s540 + $0x38] sm:$0xff]
        %v1959 = vld [vmem:[%s540 + $0x40] sm:$0xff]
        %v1960 = vld [vmem:[%s540 + $0x48] sm:$0xff]
        %v1961 = vld [vmem:[%s540 + $0x50] sm:$0xff]
        %v1962 = vld [vmem:[%s540 + $0x58] sm:$0xff]
        %v1963 = vld [vmem:[%s540 + $0x60] sm:$0xff]
        %v1964 = vld [vmem:[%s540 + $0x68] sm:$0xff]
        %v1965 = vld [vmem:[%s540 + $0x70] sm:$0xff]
        %v1966 = vld [vmem:[%s540 + $0x78] sm:$0xff]
        %1967 = vset.pattern.permute.xlu0 2
        %1968 = vperm.xlu0 %1967, %v1314
        %v1969 = vpop.permute.xlu0 %1968
        %1971 = vset.pattern.permute.xlu0 2
        %1972 = vperm.xlu0 %1971, %v1329
        %v1973 = vpop.permute.xlu0 %1972
        %1975 = vset.pattern.permute.xlu0 2
        %1976 = vperm.xlu0 %1975, %v1344
        %v1977 = vpop.permute.xlu0 %1976
        %1979 = vset.pattern.permute.xlu0 2
        %1980 = vperm.xlu0 %1979, %v1359
        %v1981 = vpop.permute.xlu0 %1980
        %1983 = vset.pattern.permute.xlu0 2
        %1984 = vperm.xlu0 %1983, %v1374
        %v1985 = vpop.permute.xlu0 %1984
        %1987 = vset.pattern.permute.xlu0 2
        %1988 = vperm.xlu0 %1987, %v1389
        %v1989 = vpop.permute.xlu0 %1988
        %1991 = vset.pattern.permute.xlu0 2
        %1992 = vperm.xlu0 %1991, %v1404
        %v1993 = vpop.permute.xlu0 %1992
        %1995 = vset.pattern.permute.xlu0 2
        %1996 = vperm.xlu0 %1995, %v1419
        %v1997 = vpop.permute.xlu0 %1996
        %1999 = vset.pattern.permute.xlu0 2
        %2000 = vperm.xlu0 %1999, %v1434
        %v2001 = vpop.permute.xlu0 %2000
        %2003 = vset.pattern.permute.xlu0 2
        %2004 = vperm.xlu0 %2003, %v1449
        %v2005 = vpop.permute.xlu0 %2004
        %2007 = vset.pattern.permute.xlu0 2
        %2008 = vperm.xlu0 %2007, %v1464
        %v2009 = vpop.permute.xlu0 %2008
        %2011 = vset.pattern.permute.xlu0 2
        %2012 = vperm.xlu0 %2011, %v1479
        %v2013 = vpop.permute.xlu0 %2012
        %2015 = vset.pattern.permute.xlu0 2
        %2016 = vperm.xlu0 %2015, %v1494
        %v2017 = vpop.permute.xlu0 %2016
        %2019 = vset.pattern.permute.xlu0 2
        %2020 = vperm.xlu0 %2019, %v1509
        %v2021 = vpop.permute.xlu0 %2020
        %2023 = vset.pattern.permute.xlu0 2
        %2024 = vperm.xlu0 %2023, %v1524
        %v2025 = vpop.permute.xlu0 %2024
        %2027 = vset.pattern.permute.xlu0 2
        %2028 = vperm.xlu0 %2027, %v1539
        %v2029 = vpop.permute.xlu0 %2028
        %v2031 = vmul.f32 %v1951, %v1969
        %v2032 = vmul.f32 %v1952, %v1973
        %v2033 = vmul.f32 %v1953, %v1977
        %v2034 = vmul.f32 %v1954, %v1981
        %v2035 = vmul.f32 %v1955, %v1985
        %v2036 = vmul.f32 %v1956, %v1989
        %v2037 = vmul.f32 %v1957, %v1993
        %v2038 = vmul.f32 %v1958, %v1997
        %v2039 = vmul.f32 %v1959, %v2001
        %v2040 = vmul.f32 %v1960, %v2005
        %v2041 = vmul.f32 %v1961, %v2009
        %v2042 = vmul.f32 %v1962, %v2013
        %v2043 = vmul.f32 %v1963, %v2017
        %v2044 = vmul.f32 %v1964, %v2021
        %v2045 = vmul.f32 %v1965, %v2025
        %v2046 = vmul.f32 %v1966, %v2029
        %v2047 = vmax.f32 %v2031, %v2035
        %v2048 = vmax.f32 %v2032, %v2036
        %v2049 = vmax.f32 %v2033, %v2037
        %v2050 = vmax.f32 %v2034, %v2038
        %v2051 = vmax.f32 %v2047, %v2039
        %v2052 = vmax.f32 %v2048, %v2040
        %v2053 = vmax.f32 %v2049, %v2041
        %v2054 = vmax.f32 %v2050, %v2042
        %v2055 = vmax.f32 %v2051, %v2043
        %v2056 = vmax.f32 %v2052, %v2044
        %v2057 = vmax.f32 %v2053, %v2045
        %v2058 = vmax.f32 %v2054, %v2046
        %v2059 = vmax.f32 %v2055, %v2056
        %v2060 = vmax.f32 %v2057, %v2058
        %v2061 = vmax.f32 %v2059, %v2060
        %v2062 = vrot.slane %v2061, 4
        %v2063 = vmax.f32 %v2061, %v2062
        %v2064 = vrot.slane %v2063, 2
        %v2065 = vmax.f32 %v2063, %v2064
        %v2066 = vrot.slane %v2065, 1
        %v2067 = vmax.f32 %v2065, %v2066
        %v2068 = vadd.f32 %v2031, %v2032
        %v2069 = vadd.f32 %v2068, %v2033
        %v2070 = vadd.f32 %v2069, %v2034
        %v2071 = vadd.f32 %v2070, %v2035
        %v2072 = vadd.f32 %v2071, %v2036
        %v2073 = vadd.f32 %v2072, %v2037
        %v2074 = vadd.f32 %v2073, %v2038
        %v2075 = vadd.f32 %v2074, %v2039
        %v2076 = vadd.f32 %v2075, %v2040
        %v2077 = vadd.f32 %v2076, %v2041
        %v2078 = vadd.f32 %v2077, %v2042
        %v2079 = vadd.f32 %v2078, %v2043
        %v2080 = vadd.f32 %v2079, %v2044
        %v2081 = vadd.f32 %v2080, %v2045
        %v2082 = vadd.f32 %v2081, %v2046
        %v2083 = vrot.slane %v2082, 4
        %v2084 = vadd.f32 %v2082, %v2083
        %v2085 = vrot.slane %v2084, 2
        %v2086 = vadd.f32 %v2084, %v2085
        %v2087 = vrot.slane %v2086, 1
        %v2088 = vadd.f32 %v2086, %v2087
        %v2089 = vmul.f32 %v2088, 0.0078125
        %v2090 = vmul.f32 %v1698, %v2067
        %v2091 = vmul.f32 %v1700, %v2089
        %v2092 = vadd.f32 %v2090, %v2091
        %v2093 = vadd.f32 %v2092, %v1703
        %v2094 = vxor.u32 %v2093, 2147483648
        %v2095 = vmul.f32 %v2094, 1.442695
        %v2096 = vpow.pop %v2095
        %v2097 = vadd.f32 %v2096, 1.0
        %v2098 = vrcp.pop %v2097
        %v2099 = vmul.f32 %v2097, %v2098
        %v2100 = vsub.f32 1.0, %v2099
        %v2101 = vmul.f32 %v2098, %v2100
        %v2102 = vadd.f32 %v2098, %v2101
        %vm2103 = vweird.f32 %v2097
        %vm2104 = vweird.f32 %v2098
        %vm2105 = vmor %vm2103, %vm2104
        %v2106 = vsel %vm2105, %v2098, %v2102
        %v2107 = vand.u32 2147483647, %v2097
        %vm2108 = vcmp.eq.f32.partialorder %v2107, 8.507059e+37
        %v2109 = vand.u32 %v2097, 2147483648
        %v2110 = vor.u32 1.1754944e-38, %v2109
        %v2111 = vsel %vm2108, %v2110, %v2106
        %v2112 = vmul.f32 1.0, %v2111
        %v2113 = vmul.f32 %v2031, %v2112
        %v2114 = vmul.f32 %v2032, %v2112
        %v2115 = vmul.f32 %v2033, %v2112
        %v2116 = vmul.f32 %v2034, %v2112
        %v2117 = vmul.f32 %v2035, %v2112
        %v2118 = vmul.f32 %v2036, %v2112
        %v2119 = vmul.f32 %v2037, %v2112
        %v2120 = vmul.f32 %v2038, %v2112
        %v2121 = vmul.f32 %v2039, %v2112
        %v2122 = vmul.f32 %v2040, %v2112
        %v2123 = vmul.f32 %v2041, %v2112
        %v2124 = vmul.f32 %v2042, %v2112
        %v2125 = vmul.f32 %v2043, %v2112
        %v2126 = vmul.f32 %v2044, %v2112
        %v2127 = vmul.f32 %v2045, %v2112
        %v2128 = vmul.f32 %v2046, %v2112
        %s2129 = scalar_lea.vmem %s276, 256 [#allocation10]
        %2130 = vst [vmem:[%s2129] sm:$0xff] %v2113
        %2131 = vst [vmem:[%s2129 + $0x8] sm:$0xff] %v2114
        %2132 = vst [vmem:[%s2129 + $0x10] sm:$0xff] %v2115
        %2133 = vst [vmem:[%s2129 + $0x18] sm:$0xff] %v2116
        %2134 = vst [vmem:[%s2129 + $0x20] sm:$0xff] %v2117
        %2135 = vst [vmem:[%s2129 + $0x28] sm:$0xff] %v2118
        %2136 = vst [vmem:[%s2129 + $0x30] sm:$0xff] %v2119
        %2137 = vst [vmem:[%s2129 + $0x38] sm:$0xff] %v2120
        %2138 = vst [vmem:[%s2129 + $0x40] sm:$0xff] %v2121
        %2139 = vst [vmem:[%s2129 + $0x48] sm:$0xff] %v2122
        %2140 = vst [vmem:[%s2129 + $0x50] sm:$0xff] %v2123
        %2141 = vst [vmem:[%s2129 + $0x58] sm:$0xff] %v2124
        %2142 = vst [vmem:[%s2129 + $0x60] sm:$0xff] %v2125
        %2143 = vst [vmem:[%s2129 + $0x68] sm:$0xff] %v2126
        %2144 = vst [vmem:[%s2129 + $0x70] sm:$0xff] %v2127
        %2145 = vst [vmem:[%s2129 + $0x78] sm:$0xff] %v2128
        %v2146 = vld [vmem:[%s671] sm:$0xff]
        %v2147 = vld [vmem:[%s671 + $0x8] sm:$0xff]
        %v2148 = vld [vmem:[%s671 + $0x10] sm:$0xff]
        %v2149 = vld [vmem:[%s671 + $0x18] sm:$0xff]
        %v2150 = vld [vmem:[%s671 + $0x20] sm:$0xff]
        %v2151 = vld [vmem:[%s671 + $0x28] sm:$0xff]
        %v2152 = vld [vmem:[%s671 + $0x30] sm:$0xff]
        %v2153 = vld [vmem:[%s671 + $0x38] sm:$0xff]
        %v2154 = vld [vmem:[%s671 + $0x40] sm:$0xff]
        %v2155 = vld [vmem:[%s671 + $0x48] sm:$0xff]
        %v2156 = vld [vmem:[%s671 + $0x50] sm:$0xff]
        %v2157 = vld [vmem:[%s671 + $0x58] sm:$0xff]
        %v2158 = vld [vmem:[%s671 + $0x60] sm:$0xff]
        %v2159 = vld [vmem:[%s671 + $0x68] sm:$0xff]
        %v2160 = vld [vmem:[%s671 + $0x70] sm:$0xff]
        %v2161 = vld [vmem:[%s671 + $0x78] sm:$0xff]
        %2162 = vset.pattern.permute.xlu0 3
        %2163 = vperm.xlu0 %2162, %v1314
        %v2164 = vpop.permute.xlu0 %2163
        %2166 = vset.pattern.permute.xlu0 3
        %2167 = vperm.xlu0 %2166, %v1329
        %v2168 = vpop.permute.xlu0 %2167
        %2170 = vset.pattern.permute.xlu0 3
        %2171 = vperm.xlu0 %2170, %v1344
        %v2172 = vpop.permute.xlu0 %2171
        %2174 = vset.pattern.permute.xlu0 3
        %2175 = vperm.xlu0 %2174, %v1359
        %v2176 = vpop.permute.xlu0 %2175
        %2178 = vset.pattern.permute.xlu0 3
        %2179 = vperm.xlu0 %2178, %v1374
        %v2180 = vpop.permute.xlu0 %2179
        %2182 = vset.pattern.permute.xlu0 3
        %2183 = vperm.xlu0 %2182, %v1389
        %v2184 = vpop.permute.xlu0 %2183
        %2186 = vset.pattern.permute.xlu0 3
        %2187 = vperm.xlu0 %2186, %v1404
        %v2188 = vpop.permute.xlu0 %2187
        %2190 = vset.pattern.permute.xlu0 3
        %2191 = vperm.xlu0 %2190, %v1419
        %v2192 = vpop.permute.xlu0 %2191
        %2194 = vset.pattern.permute.xlu0 3
        %2195 = vperm.xlu0 %2194, %v1434
        %v2196 = vpop.permute.xlu0 %2195
        %2198 = vset.pattern.permute.xlu0 3
        %2199 = vperm.xlu0 %2198, %v1449
        %v2200 = vpop.permute.xlu0 %2199
        %2202 = vset.pattern.permute.xlu0 3
        %2203 = vperm.xlu0 %2202, %v1464
        %v2204 = vpop.permute.xlu0 %2203
        %2206 = vset.pattern.permute.xlu0 3
        %2207 = vperm.xlu0 %2206, %v1479
        %v2208 = vpop.permute.xlu0 %2207
        %2210 = vset.pattern.permute.xlu0 3
        %2211 = vperm.xlu0 %2210, %v1494
        %v2212 = vpop.permute.xlu0 %2211
        %2214 = vset.pattern.permute.xlu0 3
        %2215 = vperm.xlu0 %2214, %v1509
        %v2216 = vpop.permute.xlu0 %2215
        %2218 = vset.pattern.permute.xlu0 3
        %2219 = vperm.xlu0 %2218, %v1524
        %v2220 = vpop.permute.xlu0 %2219
        %2222 = vset.pattern.permute.xlu0 3
        %2223 = vperm.xlu0 %2222, %v1539
        %v2224 = vpop.permute.xlu0 %2223
        %v2226 = vmul.f32 %v2146, %v2164
        %v2227 = vmul.f32 %v2147, %v2168
        %v2228 = vmul.f32 %v2148, %v2172
        %v2229 = vmul.f32 %v2149, %v2176
        %v2230 = vmul.f32 %v2150, %v2180
        %v2231 = vmul.f32 %v2151, %v2184
        %v2232 = vmul.f32 %v2152, %v2188
        %v2233 = vmul.f32 %v2153, %v2192
        %v2234 = vmul.f32 %v2154, %v2196
        %v2235 = vmul.f32 %v2155, %v2200
        %v2236 = vmul.f32 %v2156, %v2204
        %v2237 = vmul.f32 %v2157, %v2208
        %v2238 = vmul.f32 %v2158, %v2212
        %v2239 = vmul.f32 %v2159, %v2216
        %v2240 = vmul.f32 %v2160, %v2220
        %v2241 = vmul.f32 %v2161, %v2224
        %v2242 = vmax.f32 %v2226, %v2230
        %v2243 = vmax.f32 %v2227, %v2231
        %v2244 = vmax.f32 %v2228, %v2232
        %v2245 = vmax.f32 %v2229, %v2233
        %v2246 = vmax.f32 %v2242, %v2234
        %v2247 = vmax.f32 %v2243, %v2235
        %v2248 = vmax.f32 %v2244, %v2236
        %v2249 = vmax.f32 %v2245, %v2237
        %v2250 = vmax.f32 %v2246, %v2238
        %v2251 = vmax.f32 %v2247, %v2239
        %v2252 = vmax.f32 %v2248, %v2240
        %v2253 = vmax.f32 %v2249, %v2241
        %v2254 = vmax.f32 %v2250, %v2251
        %v2255 = vmax.f32 %v2252, %v2253
        %v2256 = vmax.f32 %v2254, %v2255
        %v2257 = vrot.slane %v2256, 4
        %v2258 = vmax.f32 %v2256, %v2257
        %v2259 = vrot.slane %v2258, 2
        %v2260 = vmax.f32 %v2258, %v2259
        %v2261 = vrot.slane %v2260, 1
        %v2262 = vmax.f32 %v2260, %v2261
        %v2263 = vadd.f32 %v2226, %v2227
        %v2264 = vadd.f32 %v2263, %v2228
        %v2265 = vadd.f32 %v2264, %v2229
        %v2266 = vadd.f32 %v2265, %v2230
        %v2267 = vadd.f32 %v2266, %v2231
        %v2268 = vadd.f32 %v2267, %v2232
        %v2269 = vadd.f32 %v2268, %v2233
        %v2270 = vadd.f32 %v2269, %v2234
        %v2271 = vadd.f32 %v2270, %v2235
        %v2272 = vadd.f32 %v2271, %v2236
        %v2273 = vadd.f32 %v2272, %v2237
        %v2274 = vadd.f32 %v2273, %v2238
        %v2275 = vadd.f32 %v2274, %v2239
        %v2276 = vadd.f32 %v2275, %v2240
        %v2277 = vadd.f32 %v2276, %v2241
        %v2278 = vrot.slane %v2277, 4
        %v2279 = vadd.f32 %v2277, %v2278
        %v2280 = vrot.slane %v2279, 2
        %v2281 = vadd.f32 %v2279, %v2280
        %v2282 = vrot.slane %v2281, 1
        %v2283 = vadd.f32 %v2281, %v2282
        %v2284 = vmul.f32 %v2283, 0.0078125
        %v2285 = vmul.f32 %v1698, %v2262
        %v2286 = vmul.f32 %v1700, %v2284
        %v2287 = vadd.f32 %v2285, %v2286
        %v2288 = vadd.f32 %v2287, %v1703
        %v2289 = vxor.u32 %v2288, 2147483648
        %v2290 = vmul.f32 %v2289, 1.442695
        %v2291 = vpow.pop %v2290
        %v2292 = vadd.f32 %v2291, 1.0
        %v2293 = vrcp.pop %v2292
        %v2294 = vmul.f32 %v2292, %v2293
        %v2295 = vsub.f32 1.0, %v2294
        %v2296 = vmul.f32 %v2293, %v2295
        %v2297 = vadd.f32 %v2293, %v2296
        %vm2298 = vweird.f32 %v2292
        %vm2299 = vweird.f32 %v2293
        %vm2300 = vmor %vm2298, %vm2299
        %v2301 = vsel %vm2300, %v2293, %v2297
        %v2302 = vand.u32 2147483647, %v2292
        %vm2303 = vcmp.eq.f32.partialorder %v2302, 8.507059e+37
        %v2304 = vand.u32 %v2292, 2147483648
        %v2305 = vor.u32 1.1754944e-38, %v2304
        %v2306 = vsel %vm2303, %v2305, %v2301
        %v2307 = vmul.f32 1.0, %v2306
        %v2308 = vmul.f32 %v2226, %v2307
        %v2309 = vmul.f32 %v2227, %v2307
        %v2310 = vmul.f32 %v2228, %v2307
        %v2311 = vmul.f32 %v2229, %v2307
        %v2312 = vmul.f32 %v2230, %v2307
        %v2313 = vmul.f32 %v2231, %v2307
        %v2314 = vmul.f32 %v2232, %v2307
        %v2315 = vmul.f32 %v2233, %v2307
        %v2316 = vmul.f32 %v2234, %v2307
        %v2317 = vmul.f32 %v2235, %v2307
        %v2318 = vmul.f32 %v2236, %v2307
        %v2319 = vmul.f32 %v2237, %v2307
        %v2320 = vmul.f32 %v2238, %v2307
        %v2321 = vmul.f32 %v2239, %v2307
        %v2322 = vmul.f32 %v2240, %v2307
        %v2323 = vmul.f32 %v2241, %v2307
        %s2324 = scalar_lea.vmem %s276, 384 [#allocation10]
        %2325 = vst [vmem:[%s2324] sm:$0xff] %v2308
        %2326 = vst [vmem:[%s2324 + $0x8] sm:$0xff] %v2309
        %2327 = vst [vmem:[%s2324 + $0x10] sm:$0xff] %v2310
        %2328 = vst [vmem:[%s2324 + $0x18] sm:$0xff] %v2311
        %2329 = vst [vmem:[%s2324 + $0x20] sm:$0xff] %v2312
        %2330 = vst [vmem:[%s2324 + $0x28] sm:$0xff] %v2313
        %2331 = vst [vmem:[%s2324 + $0x30] sm:$0xff] %v2314
        %2332 = vst [vmem:[%s2324 + $0x38] sm:$0xff] %v2315
        %2333 = vst [vmem:[%s2324 + $0x40] sm:$0xff] %v2316
        %2334 = vst [vmem:[%s2324 + $0x48] sm:$0xff] %v2317
        %2335 = vst [vmem:[%s2324 + $0x50] sm:$0xff] %v2318
        %2336 = vst [vmem:[%s2324 + $0x58] sm:$0xff] %v2319
        %2337 = vst [vmem:[%s2324 + $0x60] sm:$0xff] %v2320
        %2338 = vst [vmem:[%s2324 + $0x68] sm:$0xff] %v2321
        %2339 = vst [vmem:[%s2324 + $0x70] sm:$0xff] %v2322
        %2340 = vst [vmem:[%s2324 + $0x78] sm:$0xff] %v2323
        %s2341 = sand.u32 %s142, 1
        %s2342 = scalar_lea.sflag [#allocation5], %s2341
        %s2343 = sand.u32 %s142, 1
        %s2344 = smul.addr %s2343, 512
        %s2345 = scalar_lea.vmem [#allocation10], %s2344
        // Predicated region
        $region53: #{cbam_forward.1} parent=39 // pred_check
          %p2346 = pneg %p152
        $region54: #{cbam_forward.1} parent=39 // pred_check_branch
          %2348 = sbr.rel (%p2346) target = $region56
        $region55: #{cbam_forward.1} parent=39 // pred_region
          %s2349 = smul.u32 4, %s24
          %2351 = vsyncadd %s2342, 0
          %s2352 = smul.addr %s2349, 16
          %s2353 = smul.addr %s2352, 8
          %s2354 = scalar_lea.hbm %s5, %s2353
          %s2355 = sshll.u32 %s2345, 4
          %s2356 = int_to_ptr.vmem [resolvable:$true] %s2355
          %s2357 = sshll.u32 %s2354, 4
          %s2358 = int_to_ptr.hbm [resolvable:$true] %s2357
          %2363 = dma.vmem_to_hbm [thread:$0]  %s2356, 8192, %s2358, %s2342, 128, 128, 8
        $region56: #{cbam_forward.1} parent=39 // pred_fallthru
          _
      $region40: #{cbam_forward.1} parent=5 // pred_fallthru
        _
      %p2364 = scmp.le.s32.totalorder 2, %s19
      // Predicated region
      $region57: #{cbam_forward.1} parent=5 // pred_check
        %p2365 = pneg %p2364
      $region58: #{cbam_forward.1} parent=5 // pred_check_branch
        %2367 = sbr.rel (%p2365) target = $region60
      $region59: #{cbam_forward.1} parent=5 // pred_region
        %s2368 = ssub.s32 %s19, 2
        // Predicated region
        $region61: #{cbam_forward.1} parent=59 // pred_check
          %p2369 = pneg %p158
        $region62: #{cbam_forward.1} parent=59 // pred_check_branch
          %2371 = sbr.rel (%p2369) target = $region64
        $region63: #{cbam_forward.1} parent=59 // pred_region
          %s2372 = sand.u32 %s143, 1
          %s2373 = scalar_lea.sflag [#allocation5], %s2372
          %s2374 = sand.u32 %s143, 1
          %s2375 = smul.addr %s2374, 512
          %s2376 = scalar_lea.vmem [#allocation10], %s2375
          %2378 = dma.done %s2373, 8192
        $region64: #{cbam_forward.1} parent=59 // pred_fallthru
          _
      $region60: #{cbam_forward.1} parent=5 // pred_fallthru
        _
    $region6: #{cbam_forward.1} parent=1 // loop_footer
      %s23 = sadd.s32 1, %s19
    $region7: #{cbam_forward.1} parent=1 // loop_footer_branch
      %18 = sbr.rel target = $region3
    $region8: #{cbam_forward.1} parent=1 // loop_exit
      _
    %2379 = vsyncpa [#allocation4], 1
    %s2380 = scalar_lea.sflag [#allocation4], 1
    %2381 = vsyncpa %s2380, 1
    %2382 = vsyncpa [#allocation8], 1
    %2383 = vsyncpa [#allocation5], 1
    %s2384 = scalar_lea.sflag [#allocation5], 1
    %2385 = vsyncpa %s2384, 1
    %2386 = vsyncpa [#allocation6], 1
    %s2387 = scalar_lea.sflag [#allocation6], 1
    %2388 = vsyncpa %s2387, 1

</llo_original>
